<compile_context>
chip_gen: v7x
topology: tpu7x:2x2x1
jax: 0.10.0
libtpu: 0.0.40
codegen_flags: <defaults>
</compile_context>

<pallas_src>
import functools

import jax
import jax.numpy as jnp
from jax.experimental import pallas as pl
from jax.experimental.pallas import tpu as pltpu

LAYER_SIZE = 128
BN_EPS = 1e-5


# --------------------------------------------------------------------------
# Kernels
# --------------------------------------------------------------------------
def _conv1_vpu(x, w1):
    """Conv1d(k=1) with tiny C_in as rank-1 VPU updates (skips a K=2 MXU pass).

    The conv1 bias is intentionally omitted: training-mode BatchNorm subtracts
    the per-channel batch mean, which cancels a constant bias exactly.
    """
    c_in = x.shape[1]
    h = x[:, 0:1] * w1[0:1, :]
    for c in range(1, c_in):
        h = h + x[:, c:c + 1] * w1[c:c + 1, :]
    return h


def _stats2_kernel(x_ref, w1s_ref, sh1_ref, w2_ref, sum_ref, sq_ref,
                   *, m_valid, tm, nt_per_core, has_pad):
    """conv1 (BN1 folded into W1') -> +shift -> ReLU -> conv2 (f32 MXU);
    accumulate per-channel sum / sum-of-squares of the conv2 output.

    Grid = (core, tile).  Each core writes its own partial-stat row; the
    wrapper sums the two rows.  Padded rows only exist in the trailing tiles
    and are masked there (guarded by pl.when so full tiles pay nothing).
    """
    c = pl.program_id(0)
    j = pl.program_id(1)

    @pl.when(j == 0)
    def _():
        sum_ref[...] = jnp.zeros_like(sum_ref)
        sq_ref[...] = jnp.zeros_like(sq_ref)

    x = x_ref[...].astype(jnp.float32)
    h = jnp.maximum(_conv1_vpu(x, w1s_ref[...]) + sh1_ref[...], 0.0)
    h2 = jnp.dot(h, w2_ref[...], preferred_element_type=jnp.float32)

    def accum(v):
        sum_ref[...] += jnp.sum(v, axis=0, keepdims=True)[None]
        sq_ref[...] += jnp.sum(v * v, axis=0, keepdims=True)[None]

    if has_pad:
        start = (c * nt_per_core + j) * tm
        is_partial = start + tm > m_valid

        @pl.when(is_partial)
        def _():
            row = jax.lax.broadcasted_iota(jnp.int32, (tm, 1), 0) + start
            accum(jnp.where(row < m_valid, h2, 0.0))

        @pl.when(jnp.logical_not(is_partial))
        def _():
            accum(h2)
    else:
        accum(h2)


def _apply_kernel(x_ref, w1s_ref, sh1_ref, w2s_ref, sh2_ref, w3_ref, b3_ref,
                  o_ref):
    """Full forward with both BNs folded into (scaled weights, shift); tanh."""
    x = x_ref[...].astype(jnp.float32)
    h = jnp.maximum(_conv1_vpu(x, w1s_ref[...]) + sh1_ref[...], 0.0)
    h2 = jnp.dot(h, w2s_ref[...], preferred_element_type=jnp.float32)
    h2 = jnp.maximum(h2 + sh2_ref[...], 0.0)
    y = jnp.dot(h2, w3_ref[...], preferred_element_type=jnp.float32) + b3_ref[...]
    o_ref[...] = jnp.tanh(y).astype(o_ref.dtype)


# --------------------------------------------------------------------------
# Wrapper
# --------------------------------------------------------------------------
def _const_spec(shape):
    """Whole-array block, same block for every grid step (VMEM-resident)."""
    return pl.BlockSpec(shape, lambda *idx: tuple(0 for _ in shape))


@functools.partial(jax.jit, static_argnames=("tm",))
def patch_deformation_mlp(x, params, *, tm=2048):
    """x: (B, C_in, L) -> (B, C_out, L), matching PyTorch Conv1d layout."""
    B, c_in, L = x.shape
    c_out = params["w3"].shape[1]
    M = B * L

    # Clamp the row tile for tiny inputs; keep second-minor dim 8-aligned.
    tm = min(tm, ((M + 7) // 8) * 8)
    tm = max(8, (tm // 8) * 8)

    nt = pl.cdiv(M, tm)
    nt2 = pl.cdiv(nt, 2)          # tiles per "core" group (v7x 2-TC sharding)
    nt_total = 2 * nt2
    Mp = nt_total * tm
    has_pad = Mp != M

    # NCL -> (M, C_in): only the tiny C_in axis moves through this transpose.
    x2d = jnp.transpose(x, (0, 2, 1)).reshape(M, c_in).astype(jnp.float32)
    if has_pad:
        x2d = jnp.pad(x2d, ((0, Mp - M), (0, 0)))   # zero rows, masked/sliced

    w1, w2, w3, b3 = params["w1"], params["w2"], params["w3"], params["b3"]

    # ---- BN1 statistics in closed form (no pallas pass) --------------------
    # conv1 is linear & bias-free, so over the M valid rows:
    #   mean_h = (sum_rows(x)/M) @ W1,   E[h_j^2] = w1_j^T (X^T X / M) w1_j.
    # Zero-padded rows contribute nothing to either moment.
    col_sum = jnp.sum(x2d, axis=0, keepdims=True)          # (1, C_in)
    xtx = jnp.dot(x2d.T, x2d, preferred_element_type=jnp.float32)  # (C_in, C_in)
    mean1 = jnp.dot(col_sum / M, w1)                        # (1, 128)
    e2 = jnp.sum(w1 * jnp.dot(xtx / M, w1), axis=0, keepdims=True)
    var1 = e2 - mean1 * mean1                               # biased variance
    sc1 = params["g1"] * jax.lax.rsqrt(var1 + BN_EPS)
    sh1 = params["be1"] - mean1 * sc1
    w1s = w1 * sc1                                           # BN1 scale folded

    x_spec2 = pl.BlockSpec((tm, c_in), lambda c, j: (c * nt2 + j, 0))
    stat_spec = pl.BlockSpec((1, 1, LAYER_SIZE), lambda c, j: (c, 0, 0))
    stat_shape = jax.ShapeDtypeStruct((2, 1, LAYER_SIZE), jnp.float32)
    vlim = 64 * 1024 * 1024 if tm >= 4096 else None

    # ---- pass 1 (of 2): BN2 batch statistics -------------------------------
    psum2, psq2 = pl.pallas_call(
        functools.partial(_stats2_kernel, m_valid=M, tm=tm,
                          nt_per_core=nt2, has_pad=has_pad),
        grid=(2, nt2),
        in_specs=[x_spec2, _const_spec(w1s.shape), _const_spec(sh1.shape),
                  _const_spec(w2.shape)],
        out_specs=(stat_spec, stat_spec),
        out_shape=(stat_shape, stat_shape),
        compiler_params=pltpu.CompilerParams(
            dimension_semantics=("parallel", "arbitrary"),
            vmem_limit_bytes=vlim),
    )(x2d, w1s, sh1, w2)

    ssum2 = jnp.sum(psum2, axis=0)                          # (1, 128)
    ssq2 = jnp.sum(psq2, axis=0)
    mean2 = ssum2 / M
    var2 = ssq2 / M - mean2 * mean2                         # biased variance
    sc2 = params["g2"] * jax.lax.rsqrt(var2 + BN_EPS)
    sh2 = params["be2"] - mean2 * sc2
    w2s = w2 * sc2                                           # BN2 scale folded

    # ---- pass 2 (of 2): apply full MLP (embarrassingly parallel over M) ----
    out2d = pl.pallas_call(
        _apply_kernel,
        grid=(nt_total,),
        in_specs=[pl.BlockSpec((tm, c_in), lambda i: (i, 0)),
                  _const_spec(w1s.shape), _const_spec(sh1.shape),
                  _const_spec(w2s.shape), _const_spec(sh2.shape),
                  _const_spec(w3.shape), _const_spec(b3.shape)],
        out_specs=pl.BlockSpec((tm, c_out), lambda i: (i, 0)),
        out_shape=jax.ShapeDtypeStruct((Mp, c_out), x.dtype),
        compiler_params=pltpu.CompilerParams(
            dimension_semantics=("parallel",), vmem_limit_bytes=vlim),
    )(x2d, w1s, sh1, w2s, sh2, w3, b3)

    # Output stays per-point (M, C_out): output traffic is <2% of the total,
    # so the narrow-lane store is negligible and avoids an in-kernel transpose.
    out2d = out2d[:M]
    return jnp.transpose(out2d.reshape(B, L, c_out), (0, 2, 1))


# --------------------------------------------------------------------------
# Params / reference / demo
# --------------------------------------------------------------------------
def init_params(key, patch_dim_in, patch_dim_out):
    """Deterministic synthetic init (PyTorch-like uniform fan_in bounds)."""
    ks = jax.random.split(key, 6)

    def lin(kw, kb, fan_in, fan_out):
        bound = 1.0 / jnp.sqrt(jnp.float32(fan_in))
        w = jax.random.uniform(kw, (fan_in, fan_out), jnp.float32, -bound, bound)
        b = jax.random.uniform(kb, (1, fan_out), jnp.float32, -bound, bound)
        return w, b

    w1, b1 = lin(ks[0], ks[1], patch_dim_in, LAYER_SIZE)
    w2, b2 = lin(ks[2], ks[3], LAYER_SIZE, LAYER_SIZE)
    w3, b3 = lin(ks[4], ks[5], LAYER_SIZE, patch_dim_out)
    ones = jnp.ones((1, LAYER_SIZE), jnp.float32)
    zeros = jnp.zeros((1, LAYER_SIZE), jnp.float32)
    return {
        "w1": w1, "b1": b1, "g1": ones, "be1": zeros,
        "w2": w2, "b2": b2, "g2": ones, "be2": zeros,
        "w3": w3, "b3": b3,
    }


def _reference(x, p):
    """Pure-JAX f32 reference of the PyTorch forward (training-mode BN,
    biased variance).  Keeps the conv1/conv2 biases, verifying the kernel's
    bias-cancellation through BatchNorm."""
    h = jnp.einsum("bcl,cd->bdl", x, p["w1"]) + p["b1"].T[None]
    mu = jnp.mean(h, axis=(0, 2), keepdims=True)
    var = jnp.mean((h - mu) ** 2, axis=(0, 2), keepdims=True)
    h = (h - mu) * jax.lax.rsqrt(var + BN_EPS) * p["g1"].T[None] + p["be1"].T[None]
    h = jnp.maximum(h, 0.0)

    h = jnp.einsum("bcl,cd->bdl", h, p["w2"]) + p["b2"].T[None]
    mu = jnp.mean(h, axis=(0, 2), keepdims=True)
    var = jnp.mean((h - mu) ** 2, axis=(0, 2), keepdims=True)
    h = (h - mu) * jax.lax.rsqrt(var + BN_EPS) * p["g2"].T[None] + p["be2"].T[None]
    h = jnp.maximum(h, 0.0)

    y = jnp.einsum("bcl,cd->bdl", h, p["w3"]) + p["b3"].T[None]
    return jnp.tanh(y)


if __name__ == "__main__":
    key = jax.random.PRNGKey(0)
    k_x, k_p = jax.random.split(key)

    patch_dim_in, patch_dim_out = 2, 3   # 2D patch -> 3D surface
    B, L = 2, 320                        # M = 640 points
    # tm=256 exercises multi-tile + 2-core split + partial/padding-only tiles.
    x = jax.random.normal(k_x, (B, patch_dim_in, L), jnp.float32)
    params = init_params(k_p, patch_dim_in, patch_dim_out)

    out = patch_deformation_mlp(x, params, tm=256)
    out = jax.block_until_ready(out)

    ref = _reference(x, params)
    assert out.shape == (B, patch_dim_out, L)
    assert jnp.allclose(out, ref, atol=5e-3, rtol=5e-3), "mismatch vs JAX reference"

    print("KERNEL_OK")
</pallas_src>

<mosaic_0001>
module attributes {stable_mosaic.version = 11 : i64} {
  func.func @_stats2_kernel(%arg0: i32, %arg1: i32, %arg2: memref<256x2xf32, #tpu.memory_space<vmem>>, %arg3: memref<2x128xf32, #tpu.memory_space<vmem>>, %arg4: memref<1x128xf32, #tpu.memory_space<vmem>>, %arg5: memref<128x128xf32, #tpu.memory_space<vmem>>, %arg6: memref<1x1x128xf32, #tpu.memory_space<vmem>>, %arg7: memref<1x1x128xf32, #tpu.memory_space<vmem>>) attributes {dimension_semantics = [#tpu.dimension_semantics<parallel>, #tpu.dimension_semantics<arbitrary>], iteration_bounds = array<i64: 2, 2>, scalar_prefetch = 0 : i64, scratch_operands = 0 : i64, tpu.core_type = #tpu.core_type<tc>, window_params = [{transform_indices = @transform_0, window_bounds = array<i64: 256, 2>}, {pipeline_mode = #tpu.pipeline_mode<synchronous>, transform_indices = @transform_1, window_bounds = array<i64: 2, 128>}, {pipeline_mode = #tpu.pipeline_mode<synchronous>, transform_indices = @transform_2, window_bounds = array<i64: 1, 128>}, {pipeline_mode = #tpu.pipeline_mode<synchronous>, transform_indices = @transform_3, window_bounds = array<i64: 128, 128>}, {transform_indices = @transform_4, window_bounds = array<i64: 1, 1, 128>}, {transform_indices = @transform_5, window_bounds = array<i64: 1, 1, 128>}]} {
    %c0_i32 = arith.constant 0 : i32
    %0 = arith.cmpi eq, %arg1, %c0_i32 : i32
    %1 = arith.extui %0 : i1 to i32
    %c0_i32_0 = arith.constant 0 : i32
    %2 = arith.cmpi ne, %1, %c0_i32_0 : i32
    scf.if %2 {
      %cst_12 = arith.constant 0.000000e+00 : f32
      %33 = vector.broadcast %cst_12 : f32 to vector<1x1x128xf32>
      %c0_13 = arith.constant 0 : index
      %c0_14 = arith.constant 0 : index
      %c0_15 = arith.constant 0 : index
      %34 = vector.load %arg6[%c0_13, %c0_14, %c0_15] : memref<1x1x128xf32, #tpu.memory_space<vmem>>, vector<1x1x128xf32>
      tpu.vector_store %arg6[%c0_13, %c0_14, %c0_15], %33 {strides = array<i32>} : memref<1x1x128xf32, #tpu.memory_space<vmem>>, vector<1x1x128xf32>,
      %cst_16 = arith.constant 0.000000e+00 : f32
      %35 = vector.broadcast %cst_16 : f32 to vector<1x1x128xf32>
      %c0_17 = arith.constant 0 : index
      %c0_18 = arith.constant 0 : index
      %c0_19 = arith.constant 0 : index
      %36 = vector.load %arg7[%c0_17, %c0_18, %c0_19] : memref<1x1x128xf32, #tpu.memory_space<vmem>>, vector<1x1x128xf32>
      tpu.vector_store %arg7[%c0_17, %c0_18, %c0_19], %35 {strides = array<i32>} : memref<1x1x128xf32, #tpu.memory_space<vmem>>, vector<1x1x128xf32>,
    } else {
    }
    %c0 = arith.constant 0 : index
    %c0_1 = arith.constant 0 : index
    %3 = vector.load %arg2[%c0, %c0_1] : memref<256x2xf32, #tpu.memory_space<vmem>>, vector<256x2xf32>
    %c0_2 = arith.constant 0 : index
    %c0_3 = arith.constant 0 : index
    %4 = vector.load %arg3[%c0_2, %c0_3] : memref<2x128xf32, #tpu.memory_space<vmem>>, vector<2x128xf32>
    %5 = vector.extract_strided_slice %3 {offsets = [0, 0], sizes = [256, 1], strides = [1, 1]} : vector<256x2xf32> to vector<256x1xf32>
    %6 = vector.extract_strided_slice %4 {offsets = [0, 0], sizes = [1, 128], strides = [1, 1]} : vector<2x128xf32> to vector<1x128xf32>
    %7 = vector.broadcast %5 : vector<256x1xf32> to vector<256x128xf32>
    %8 = vector.broadcast %6 : vector<1x128xf32> to vector<256x128xf32>
    %9 = arith.mulf %7, %8 : vector<256x128xf32>
    %10 = vector.extract_strided_slice %3 {offsets = [0, 1], sizes = [256, 1], strides = [1, 1]} : vector<256x2xf32> to vector<256x1xf32>
    %11 = vector.extract_strided_slice %4 {offsets = [1, 0], sizes = [1, 128], strides = [1, 1]} : vector<2x128xf32> to vector<1x128xf32>
    %12 = vector.broadcast %10 : vector<256x1xf32> to vector<256x128xf32>
    %13 = vector.broadcast %11 : vector<1x128xf32> to vector<256x128xf32>
    %14 = arith.mulf %12, %13 : vector<256x128xf32>
    %15 = arith.addf %9, %14 : vector<256x128xf32>
    %c0_4 = arith.constant 0 : index
    %c0_5 = arith.constant 0 : index
    %16 = vector.load %arg4[%c0_4, %c0_5] : memref<1x128xf32, #tpu.memory_space<vmem>>, vector<1x128xf32>
    %17 = vector.broadcast %16 : vector<1x128xf32> to vector<256x128xf32>
    %18 = arith.addf %15, %17 : vector<256x128xf32>
    %cst = arith.constant 0.000000e+00 : f32
    %19 = vector.broadcast %cst : f32 to vector<256x128xf32>
    %20 = arith.maximumf %18, %19 : vector<256x128xf32>
    %c0_6 = arith.constant 0 : index
    %c0_7 = arith.constant 0 : index
    %21 = vector.load %arg5[%c0_6, %c0_7] : memref<128x128xf32, #tpu.memory_space<vmem>>, vector<128x128xf32>
    %cst_8 = arith.constant dense<0.000000e+00> : vector<256x128xf32>
    %22 = tpu.matmul %20, %21, %cst_8 {dimension_numbers = #tpu.dot_dimension_numbers<[1], [0], [0], [1], [0, 0, 1, 1], [], []>} : vector<256x128xf32>, vector<128x128xf32>, vector<256x128xf32> -> vector<256x128xf32>
    %c2_i32 = arith.constant 2 : i32
    %23 = arith.muli %arg0, %c2_i32 : i32
    %24 = arith.addi %23, %arg1 : i32
    %c256_i32 = arith.constant 256 : i32
    %25 = arith.muli %24, %c256_i32 : i32
    %c256_i32_9 = arith.constant 256 : i32
    %26 = arith.addi %25, %c256_i32_9 : i32
    %c640_i32 = arith.constant 640 : i32
    %27 = arith.cmpi sgt, %26, %c640_i32 : i32
    %28 = arith.extui %27 : i1 to i32
    %c0_i32_10 = arith.constant 0 : i32
    %29 = arith.cmpi ne, %28, %c0_i32_10 : i32
    scf.if %29 {
      %33 = tpu.iota {dimensions = array<i32: 0>} : vector<256x1xi32>
      %34 = vector.broadcast %25 : i32 to vector<256x1xi32>
      %35 = arith.addi %33, %34 : vector<256x1xi32>
      %c640_i32_12 = arith.constant 640 : i32
      %36 = vector.broadcast %c640_i32_12 : i32 to vector<256x1xi32>
      %37 = arith.cmpi slt, %35, %36 : vector<256x1xi32>
      %cst_13 = arith.constant 0.000000e+00 : f32
      %38 = vector.shape_cast %37 : vector<256x1xi1> to vector<256x1xi1>
      %39 = vector.broadcast %38 : vector<256x1xi1> to vector<256x128xi1>
      %40 = vector.broadcast %cst_13 : f32 to vector<256x128xf32>
      %41 = arith.select %39, %22, %40 : vector<256x128xi1>, vector<256x128xf32>
      %c0_14 = arith.constant 0 : index
      %c0_15 = arith.constant 0 : index
      %c0_16 = arith.constant 0 : index
      %42 = vector.load %arg6[%c0_14, %c0_15, %c0_16] : memref<1x1x128xf32, #tpu.memory_space<vmem>>, vector<1x1x128xf32>
      %cst_17 = arith.constant dense<0.000000e+00> : vector<128xf32>
      %43 = vector.multi_reduction <add>, %41, %cst_17 [0] : vector<256x128xf32> to vector<128xf32>
      %44 = vector.shape_cast %43 : vector<128xf32> to vector<1x128xf32>
      %45 = vector.shape_cast %44 : vector<1x128xf32> to vector<1x1x128xf32>
      %46 = arith.addf %42, %45 : vector<1x1x128xf32>
      %c0_18 = arith.constant 0 : index
      %c0_19 = arith.constant 0 : index
      %c0_20 = arith.constant 0 : index
      %47 = vector.load %arg6[%c0_18, %c0_19, %c0_20] : memref<1x1x128xf32, #tpu.memory_space<vmem>>, vector<1x1x128xf32>
      tpu.vector_store %arg6[%c0_18, %c0_19, %c0_20], %46 {strides = array<i32>} : memref<1x1x128xf32, #tpu.memory_space<vmem>>, vector<1x1x128xf32>,
      %c0_21 = arith.constant 0 : index
      %c0_22 = arith.constant 0 : index
      %c0_23 = arith.constant 0 : index
      %48 = vector.load %arg7[%c0_21, %c0_22, %c0_23] : memref<1x1x128xf32, #tpu.memory_space<vmem>>, vector<1x1x128xf32>
      %49 = arith.mulf %41, %41 : vector<256x128xf32>
      %cst_24 = arith.constant dense<0.000000e+00> : vector<128xf32>
      %50 = vector.multi_reduction <add>, %49, %cst_24 [0] : vector<256x128xf32> to vector<128xf32>
      %51 = vector.shape_cast %50 : vector<128xf32> to vector<1x128xf32>
      %52 = vector.shape_cast %51 : vector<1x128xf32> to vector<1x1x128xf32>
      %53 = arith.addf %48, %52 : vector<1x1x128xf32>
      %c0_25 = arith.constant 0 : index
      %c0_26 = arith.constant 0 : index
      %c0_27 = arith.constant 0 : index
      %54 = vector.load %arg7[%c0_25, %c0_26, %c0_27] : memref<1x1x128xf32, #tpu.memory_space<vmem>>, vector<1x1x128xf32>
      tpu.vector_store %arg7[%c0_25, %c0_26, %c0_27], %53 {strides = array<i32>} : memref<1x1x128xf32, #tpu.memory_space<vmem>>, vector<1x1x128xf32>,
    } else {
    }
    %true = arith.constant true
    %30 = arith.xori %27, %true : i1
    %31 = arith.extui %30 : i1 to i32
    %c0_i32_11 = arith.constant 0 : i32
    %32 = arith.cmpi ne, %31, %c0_i32_11 : i32
    scf.if %32 {
      %c0_12 = arith.constant 0 : index
      %c0_13 = arith.constant 0 : index
      %c0_14 = arith.constant 0 : index
      %33 = vector.load %arg6[%c0_12, %c0_13, %c0_14] : memref<1x1x128xf32, #tpu.memory_space<vmem>>, vector<1x1x128xf32>
      %cst_15 = arith.constant dense<0.000000e+00> : vector<128xf32>
      %34 = vector.multi_reduction <add>, %22, %cst_15 [0] : vector<256x128xf32> to vector<128xf32>
      %35 = vector.shape_cast %34 : vector<128xf32> to vector<1x128xf32>
      %36 = vector.shape_cast %35 : vector<1x128xf32> to vector<1x1x128xf32>
      %37 = arith.addf %33, %36 : vector<1x1x128xf32>
      %c0_16 = arith.constant 0 : index
      %c0_17 = arith.constant 0 : index
      %c0_18 = arith.constant 0 : index
      %38 = vector.load %arg6[%c0_16, %c0_17, %c0_18] : memref<1x1x128xf32, #tpu.memory_space<vmem>>, vector<1x1x128xf32>
      tpu.vector_store %arg6[%c0_16, %c0_17, %c0_18], %37 {strides = array<i32>} : memref<1x1x128xf32, #tpu.memory_space<vmem>>, vector<1x1x128xf32>,
      %c0_19 = arith.constant 0 : index
      %c0_20 = arith.constant 0 : index
      %c0_21 = arith.constant 0 : index
      %39 = vector.load %arg7[%c0_19, %c0_20, %c0_21] : memref<1x1x128xf32, #tpu.memory_space<vmem>>, vector<1x1x128xf32>
      %40 = arith.mulf %22, %22 : vector<256x128xf32>
      %cst_22 = arith.constant dense<0.000000e+00> : vector<128xf32>
      %41 = vector.multi_reduction <add>, %40, %cst_22 [0] : vector<256x128xf32> to vector<128xf32>
      %42 = vector.shape_cast %41 : vector<128xf32> to vector<1x128xf32>
      %43 = vector.shape_cast %42 : vector<1x128xf32> to vector<1x1x128xf32>
      %44 = arith.addf %39, %43 : vector<1x1x128xf32>
      %c0_23 = arith.constant 0 : index
      %c0_24 = arith.constant 0 : index
      %c0_25 = arith.constant 0 : index
      %45 = vector.load %arg7[%c0_23, %c0_24, %c0_25] : memref<1x1x128xf32, #tpu.memory_space<vmem>>, vector<1x1x128xf32>
      tpu.vector_store %arg7[%c0_23, %c0_24, %c0_25], %44 {strides = array<i32>} : memref<1x1x128xf32, #tpu.memory_space<vmem>>, vector<1x1x128xf32>,
    } else {
    }
    return
  }
  func.func @transform_0(%arg0: i32, %arg1: i32) -> (i32, i32) {
    %c2_i32 = arith.constant 2 : i32
    %0 = arith.muli %arg0, %c2_i32 : i32
    %1 = arith.addi %0, %arg1 : i32
    %c0_i32 = arith.constant 0 : i32
    %c0_i32_0 = arith.constant 0 : i32
    return %1, %c0_i32 : i32, i32
  }
  func.func @transform_1(%arg0: i32, %arg1: i32) -> (i32, i32) {
    %c0_i32 = arith.constant 0 : i32
    %c0_i32_0 = arith.constant 0 : i32
    %c0_i32_1 = arith.constant 0 : i32
    return %c0_i32, %c0_i32_0 : i32, i32
  }
  func.func @transform_2(%arg0: i32, %arg1: i32) -> (i32, i32) {
    %c0_i32 = arith.constant 0 : i32
    %c0_i32_0 = arith.constant 0 : i32
    %c0_i32_1 = arith.constant 0 : i32
    return %c0_i32, %c0_i32_0 : i32, i32
  }
  func.func @transform_3(%arg0: i32, %arg1: i32) -> (i32, i32) {
    %c0_i32 = arith.constant 0 : i32
    %c0_i32_0 = arith.constant 0 : i32
    %c0_i32_1 = arith.constant 0 : i32
    return %c0_i32, %c0_i32_0 : i32, i32
  }
  func.func @transform_4(%arg0: i32, %arg1: i32) -> (i32, i32, i32) {
    %c0_i32 = arith.constant 0 : i32
    %c0_i32_0 = arith.constant 0 : i32
    %c0_i32_1 = arith.constant 0 : i32
    return %arg0, %c0_i32, %c0_i32_0 : i32, i32, i32
  }
  func.func @transform_5(%arg0: i32, %arg1: i32) -> (i32, i32, i32) {
    %c0_i32 = arith.constant 0 : i32
    %c0_i32_0 = arith.constant 0 : i32
    %c0_i32_1 = arith.constant 0 : i32
    return %arg0, %c0_i32, %c0_i32_0 : i32, i32, i32
  }
}

module attributes {stable_mosaic.version = 11 : i64} {
  func.func @_apply_kernel(%arg0: i32, %arg1: memref<256x2xf32, #tpu.memory_space<vmem>>, %arg2: memref<2x128xf32, #tpu.memory_space<vmem>>, %arg3: memref<1x128xf32, #tpu.memory_space<vmem>>, %arg4: memref<128x128xf32, #tpu.memory_space<vmem>>, %arg5: memref<1x128xf32, #tpu.memory_space<vmem>>, %arg6: memref<128x3xf32, #tpu.memory_space<vmem>>, %arg7: memref<1x3xf32, #tpu.memory_space<vmem>>, %arg8: memref<256x3xf32, #tpu.memory_space<vmem>>) attributes {dimension_semantics = [#tpu.dimension_semantics<parallel>], iteration_bounds = array<i64: 4>, scalar_prefetch = 0 : i64, scratch_operands = 0 : i64, tpu.core_type = #tpu.core_type<tc>, window_params = [{transform_indices = @transform_0, window_bounds = array<i64: 256, 2>}, {pipeline_mode = #tpu.pipeline_mode<synchronous>, transform_indices = @transform_1, window_bounds = array<i64: 2, 128>}, {pipeline_mode = #tpu.pipeline_mode<synchronous>, transform_indices = @transform_2, window_bounds = array<i64: 1, 128>}, {pipeline_mode = #tpu.pipeline_mode<synchronous>, transform_indices = @transform_3, window_bounds = array<i64: 128, 128>}, {pipeline_mode = #tpu.pipeline_mode<synchronous>, transform_indices = @transform_4, window_bounds = array<i64: 1, 128>}, {pipeline_mode = #tpu.pipeline_mode<synchronous>, transform_indices = @transform_5, window_bounds = array<i64: 128, 3>}, {pipeline_mode = #tpu.pipeline_mode<synchronous>, transform_indices = @transform_6, window_bounds = array<i64: 1, 3>}, {transform_indices = @transform_7, window_bounds = array<i64: 256, 3>}]} {
    %c0 = arith.constant 0 : index
    %c0_0 = arith.constant 0 : index
    %0 = vector.load %arg1[%c0, %c0_0] : memref<256x2xf32, #tpu.memory_space<vmem>>, vector<256x2xf32>
    %c0_1 = arith.constant 0 : index
    %c0_2 = arith.constant 0 : index
    %1 = vector.load %arg2[%c0_1, %c0_2] : memref<2x128xf32, #tpu.memory_space<vmem>>, vector<2x128xf32>
    %2 = vector.extract_strided_slice %0 {offsets = [0, 0], sizes = [256, 1], strides = [1, 1]} : vector<256x2xf32> to vector<256x1xf32>
    %3 = vector.extract_strided_slice %1 {offsets = [0, 0], sizes = [1, 128], strides = [1, 1]} : vector<2x128xf32> to vector<1x128xf32>
    %4 = vector.broadcast %2 : vector<256x1xf32> to vector<256x128xf32>
    %5 = vector.broadcast %3 : vector<1x128xf32> to vector<256x128xf32>
    %6 = arith.mulf %4, %5 : vector<256x128xf32>
    %7 = vector.extract_strided_slice %0 {offsets = [0, 1], sizes = [256, 1], strides = [1, 1]} : vector<256x2xf32> to vector<256x1xf32>
    %8 = vector.extract_strided_slice %1 {offsets = [1, 0], sizes = [1, 128], strides = [1, 1]} : vector<2x128xf32> to vector<1x128xf32>
    %9 = vector.broadcast %7 : vector<256x1xf32> to vector<256x128xf32>
    %10 = vector.broadcast %8 : vector<1x128xf32> to vector<256x128xf32>
    %11 = arith.mulf %9, %10 : vector<256x128xf32>
    %12 = arith.addf %6, %11 : vector<256x128xf32>
    %c0_3 = arith.constant 0 : index
    %c0_4 = arith.constant 0 : index
    %13 = vector.load %arg3[%c0_3, %c0_4] : memref<1x128xf32, #tpu.memory_space<vmem>>, vector<1x128xf32>
    %14 = vector.broadcast %13 : vector<1x128xf32> to vector<256x128xf32>
    %15 = arith.addf %12, %14 : vector<256x128xf32>
    %cst = arith.constant 0.000000e+00 : f32
    %16 = vector.broadcast %cst : f32 to vector<256x128xf32>
    %17 = arith.maximumf %15, %16 : vector<256x128xf32>
    %c0_5 = arith.constant 0 : index
    %c0_6 = arith.constant 0 : index
    %18 = vector.load %arg4[%c0_5, %c0_6] : memref<128x128xf32, #tpu.memory_space<vmem>>, vector<128x128xf32>
    %cst_7 = arith.constant dense<0.000000e+00> : vector<256x128xf32>
    %19 = tpu.matmul %17, %18, %cst_7 {dimension_numbers = #tpu.dot_dimension_numbers<[1], [0], [0], [1], [0, 0, 1, 1], [], []>} : vector<256x128xf32>, vector<128x128xf32>, vector<256x128xf32> -> vector<256x128xf32>
    %c0_8 = arith.constant 0 : index
    %c0_9 = arith.constant 0 : index
    %20 = vector.load %arg5[%c0_8, %c0_9] : memref<1x128xf32, #tpu.memory_space<vmem>>, vector<1x128xf32>
    %21 = vector.broadcast %20 : vector<1x128xf32> to vector<256x128xf32>
    %22 = arith.addf %19, %21 : vector<256x128xf32>
    %cst_10 = arith.constant 0.000000e+00 : f32
    %23 = vector.broadcast %cst_10 : f32 to vector<256x128xf32>
    %24 = arith.maximumf %22, %23 : vector<256x128xf32>
    %c0_11 = arith.constant 0 : index
    %c0_12 = arith.constant 0 : index
    %25 = vector.load %arg6[%c0_11, %c0_12] : memref<128x3xf32, #tpu.memory_space<vmem>>, vector<128x3xf32>
    %cst_13 = arith.constant dense<0.000000e+00> : vector<256x3xf32>
    %26 = tpu.matmul %24, %25, %cst_13 {dimension_numbers = #tpu.dot_dimension_numbers<[1], [0], [0], [1], [0, 0, 1, 1], [], []>} : vector<256x128xf32>, vector<128x3xf32>, vector<256x3xf32> -> vector<256x3xf32>
    %c0_14 = arith.constant 0 : index
    %c0_15 = arith.constant 0 : index
    %27 = vector.load %arg7[%c0_14, %c0_15] : memref<1x3xf32, #tpu.memory_space<vmem>>, vector<1x3xf32>
    %28 = vector.broadcast %27 : vector<1x3xf32> to vector<256x3xf32>
    %29 = arith.addf %26, %28 : vector<256x3xf32>
    %30 = math.tanh %29 : vector<256x3xf32>
    %c0_16 = arith.constant 0 : index
    %c0_17 = arith.constant 0 : index
    %31 = vector.load %arg8[%c0_16, %c0_17] : memref<256x3xf32, #tpu.memory_space<vmem>>, vector<256x3xf32>
    tpu.vector_store %arg8[%c0_16, %c0_17], %30 {strides = array<i32>} : memref<256x3xf32, #tpu.memory_space<vmem>>, vector<256x3xf32>,
    return
  }
  func.func @transform_0(%arg0: i32) -> (i32, i32) {
    %c0_i32 = arith.constant 0 : i32
    %c0_i32_0 = arith.constant 0 : i32
    return %arg0, %c0_i32 : i32, i32
  }
  func.func @transform_1(%arg0: i32) -> (i32, i32) {
    %c0_i32 = arith.constant 0 : i32
    %c0_i32_0 = arith.constant 0 : i32
    %c0_i32_1 = arith.constant 0 : i32
    return %c0_i32, %c0_i32_0 : i32, i32
  }
  func.func @transform_2(%arg0: i32) -> (i32, i32) {
    %c0_i32 = arith.constant 0 : i32
    %c0_i32_0 = arith.constant 0 : i32
    %c0_i32_1 = arith.constant 0 : i32
    return %c0_i32, %c0_i32_0 : i32, i32
  }
  func.func @transform_3(%arg0: i32) -> (i32, i32) {
    %c0_i32 = arith.constant 0 : i32
    %c0_i32_0 = arith.constant 0 : i32
    %c0_i32_1 = arith.constant 0 : i32
    return %c0_i32, %c0_i32_0 : i32, i32
  }
  func.func @transform_4(%arg0: i32) -> (i32, i32) {
    %c0_i32 = arith.constant 0 : i32
    %c0_i32_0 = arith.constant 0 : i32
    %c0_i32_1 = arith.constant 0 : i32
    return %c0_i32, %c0_i32_0 : i32, i32
  }
  func.func @transform_5(%arg0: i32) -> (i32, i32) {
    %c0_i32 = arith.constant 0 : i32
    %c0_i32_0 = arith.constant 0 : i32
    %c0_i32_1 = arith.constant 0 : i32
    return %c0_i32, %c0_i32_0 : i32, i32
  }
  func.func @transform_6(%arg0: i32) -> (i32, i32) {
    %c0_i32 = arith.constant 0 : i32
    %c0_i32_0 = arith.constant 0 : i32
    %c0_i32_1 = arith.constant 0 : i32
    return %c0_i32, %c0_i32_0 : i32, i32
  }
  func.func @transform_7(%arg0: i32) -> (i32, i32) {
    %c0_i32 = arith.constant 0 : i32
    %c0_i32_0 = arith.constant 0 : i32
    return %arg0, %c0_i32 : i32, i32
  }
}

</mosaic_0001>

<llo_original>
// kernel: patch_deformation_mlp.3
$region0: #{patch_deformation_mlp.3}
  #allocation0 [shape = 'u32[]', space=smem, size = 0x4, offset = 0x4, fixed_abs, tag = 'smem constant byte address 0x4 - core index']
  #allocation1 [shape = 'u32[144,128]{1,0:T(1,128)}', space=vmem, size = 0x12000, scoped, tag = 'internal scratch']
  %s0 = inlined_call_operand.vmem [shape: f32[1024,2], index: 0, kind: input, shape index: {}]
  %s1 = inlined_call_operand.vmem [shape: f32[2,128], index: 1, kind: input, shape index: {}]
  %s2 = inlined_call_operand.vmem [shape: f32[1,128], index: 2, kind: input, shape index: {}]
  %s3 = inlined_call_operand.vmem [shape: f32[128,128], index: 3, kind: input, shape index: {}]
  %s4 = inlined_call_operand.vmem [shape: f32[1,128], index: 4, kind: input, shape index: {}]
  %s5 = inlined_call_operand.vmem [shape: f32[128,3], index: 5, kind: input, shape index: {}]
  %s6 = inlined_call_operand.vmem [shape: f32[1,3], index: 6, kind: input, shape index: {}]
  %s7 = inlined_call_operand.vmem [shape: f32[1024,3], index: 7, kind: output, shape index: {}]
  %s8 = sld [smem:[#allocation0]]
  $region61: #{patch_deformation_mlp.3} parent=0
    _
  %s10 = ssub.s32 1, %s8
  %s11 = scalar_select 0, %s10, %s8
  loop: start=0, step=1, limit=6
  $region2: #{patch_deformation_mlp.3} parent=0 // loop_pre_header
    _
  $region3: #{patch_deformation_mlp.3} parent=0 // loop_header
    %s13 = sphi 0, %s17
    %p14 = scmp.ge.s32.totalorder %s13, 6
    %s23 = sphi 0, %s25
    %s26 = sphi 0, %s23
    %s27 = sphi 0, %s26
    %s43 = sphi 0, %s27
    %s47 = sphi 0, %s47
    %s49 = sphi 0, %s47
    %s50 = sphi 0, %s49
    %s64 = sphi 0, %s50
    %s68 = sphi 0, %s68
    %s70 = sphi 0, %s68
    %s71 = sphi 0, %s70
    %s85 = sphi 0, %s71
    %s89 = sphi 0, %s89
    %s91 = sphi 0, %s89
    %s92 = sphi 0, %s91
    %s106 = sphi 0, %s92
    %s110 = sphi 0, %s110
    %s112 = sphi 0, %s110
    %s113 = sphi 0, %s112
    %s127 = sphi 0, %s113
    %s131 = sphi 0, %s131
    %s133 = sphi 0, %s131
    %s134 = sphi 0, %s133
    %s148 = sphi 0, %s134
    %s152 = sphi 0, %s152
    %s154 = sphi 0, %s152
    %s155 = sphi 0, %s154
    %s169 = sphi 0, %s155
    %s175 = sphi 0, %s177
    %s178 = sphi 0, %s175
    %s179 = sphi 0, %s178
    %s195 = sphi 0, %s179
  $region4: #{patch_deformation_mlp.3} parent=0 // loop_header_branch
    %16 = sbr.rel (%p14) target = $region8
  $region5: #{patch_deformation_mlp.3} parent=0 // loop_body
    %s18 = ssub.s32 %s13, 1
    %s19 = ssub.s32 %s13, 2
    %s20 = sadd.s32 %s13, 1
    %s21 = ssub.s32 %s13, %s20
    %p22 = scmp.eq.s32.totalorder %s21, 0
    %s24 = sadd.s32 %s23, 1
    %s25 = scalar_select %p22, %s23, %s24
    %p28 = pneg %p22
    %p29 = scmp.eq.s32.totalorder %s13, 3
    %p30 = por %p28, %p29
    %p31 = scmp.ne.s32.totalorder %s23, %s26
    %p32 = scmp.eq.s32.totalorder %s13, 0
    %p33 = por %p31, %p32
    %p34 = scmp.ne.s32.totalorder %s23, %s26
    %p35 = scmp.eq.s32.totalorder %s18, 3
    %p36 = por %p34, %p35
    %p37 = scmp.ne.s32.totalorder %s26, %s27
    %p38 = scmp.eq.s32.totalorder %s18, 0
    %p39 = por %p37, %p38
    %p40 = scmp.ne.s32.totalorder %s26, %s27
    %p41 = scmp.eq.s32.totalorder %s19, 3
    %p42 = por %p40, %p41
    %p44 = scmp.ne.s32.totalorder %s27, %s43
    %p45 = scmp.eq.s32.totalorder %s19, 0
    %p46 = por %p44, %p45
    %s48 = sadd.s32 %s47, 1
    %p51 = scmp.eq.s32.totalorder %s13, 3
    %p52 = scmp.ne.s32.totalorder %s47, %s49
    %p53 = scmp.eq.s32.totalorder %s13, 0
    %p54 = por %p52, %p53
    %p55 = scmp.ne.s32.totalorder %s47, %s49
    %p56 = scmp.eq.s32.totalorder %s18, 3
    %p57 = por %p55, %p56
    %p58 = scmp.ne.s32.totalorder %s49, %s50
    %p59 = scmp.eq.s32.totalorder %s18, 0
    %p60 = por %p58, %p59
    %p61 = scmp.ne.s32.totalorder %s49, %s50
    %p62 = scmp.eq.s32.totalorder %s19, 3
    %p63 = por %p61, %p62
    %p65 = scmp.ne.s32.totalorder %s50, %s64
    %p66 = scmp.eq.s32.totalorder %s19, 0
    %p67 = por %p65, %p66
    %s69 = sadd.s32 %s68, 1
    %p72 = scmp.eq.s32.totalorder %s13, 3
    %p73 = scmp.ne.s32.totalorder %s68, %s70
    %p74 = scmp.eq.s32.totalorder %s13, 0
    %p75 = por %p73, %p74
    %p76 = scmp.ne.s32.totalorder %s68, %s70
    %p77 = scmp.eq.s32.totalorder %s18, 3
    %p78 = por %p76, %p77
    %p79 = scmp.ne.s32.totalorder %s70, %s71
    %p80 = scmp.eq.s32.totalorder %s18, 0
    %p81 = por %p79, %p80
    %p82 = scmp.ne.s32.totalorder %s70, %s71
    %p83 = scmp.eq.s32.totalorder %s19, 3
    %p84 = por %p82, %p83
    %p86 = scmp.ne.s32.totalorder %s71, %s85
    %p87 = scmp.eq.s32.totalorder %s19, 0
    %p88 = por %p86, %p87
    %s90 = sadd.s32 %s89, 1
    %p93 = scmp.eq.s32.totalorder %s13, 3
    %p94 = scmp.ne.s32.totalorder %s89, %s91
    %p95 = scmp.eq.s32.totalorder %s13, 0
    %p96 = por %p94, %p95
    %p97 = scmp.ne.s32.totalorder %s89, %s91
    %p98 = scmp.eq.s32.totalorder %s18, 3
    %p99 = por %p97, %p98
    %p100 = scmp.ne.s32.totalorder %s91, %s92
    %p101 = scmp.eq.s32.totalorder %s18, 0
    %p102 = por %p100, %p101
    %p103 = scmp.ne.s32.totalorder %s91, %s92
    %p104 = scmp.eq.s32.totalorder %s19, 3
    %p105 = por %p103, %p104
    %p107 = scmp.ne.s32.totalorder %s92, %s106
    %p108 = scmp.eq.s32.totalorder %s19, 0
    %p109 = por %p107, %p108
    %s111 = sadd.s32 %s110, 1
    %p114 = scmp.eq.s32.totalorder %s13, 3
    %p115 = scmp.ne.s32.totalorder %s110, %s112
    %p116 = scmp.eq.s32.totalorder %s13, 0
    %p117 = por %p115, %p116
    %p118 = scmp.ne.s32.totalorder %s110, %s112
    %p119 = scmp.eq.s32.totalorder %s18, 3
    %p120 = por %p118, %p119
    %p121 = scmp.ne.s32.totalorder %s112, %s113
    %p122 = scmp.eq.s32.totalorder %s18, 0
    %p123 = por %p121, %p122
    %p124 = scmp.ne.s32.totalorder %s112, %s113
    %p125 = scmp.eq.s32.totalorder %s19, 3
    %p126 = por %p124, %p125
    %p128 = scmp.ne.s32.totalorder %s113, %s127
    %p129 = scmp.eq.s32.totalorder %s19, 0
    %p130 = por %p128, %p129
    %s132 = sadd.s32 %s131, 1
    %p135 = scmp.eq.s32.totalorder %s13, 3
    %p136 = scmp.ne.s32.totalorder %s131, %s133
    %p137 = scmp.eq.s32.totalorder %s13, 0
    %p138 = por %p136, %p137
    %p139 = scmp.ne.s32.totalorder %s131, %s133
    %p140 = scmp.eq.s32.totalorder %s18, 3
    %p141 = por %p139, %p140
    %p142 = scmp.ne.s32.totalorder %s133, %s134
    %p143 = scmp.eq.s32.totalorder %s18, 0
    %p144 = por %p142, %p143
    %p145 = scmp.ne.s32.totalorder %s133, %s134
    %p146 = scmp.eq.s32.totalorder %s19, 3
    %p147 = por %p145, %p146
    %p149 = scmp.ne.s32.totalorder %s134, %s148
    %p150 = scmp.eq.s32.totalorder %s19, 0
    %p151 = por %p149, %p150
    %s153 = sadd.s32 %s152, 1
    %p156 = scmp.eq.s32.totalorder %s13, 3
    %p157 = scmp.ne.s32.totalorder %s152, %s154
    %p158 = scmp.eq.s32.totalorder %s13, 0
    %p159 = por %p157, %p158
    %p160 = scmp.ne.s32.totalorder %s152, %s154
    %p161 = scmp.eq.s32.totalorder %s18, 3
    %p162 = por %p160, %p161
    %p163 = scmp.ne.s32.totalorder %s154, %s155
    %p164 = scmp.eq.s32.totalorder %s18, 0
    %p165 = por %p163, %p164
    %p166 = scmp.ne.s32.totalorder %s154, %s155
    %p167 = scmp.eq.s32.totalorder %s19, 3
    %p168 = por %p166, %p167
    %p170 = scmp.ne.s32.totalorder %s155, %s169
    %p171 = scmp.eq.s32.totalorder %s19, 0
    %p172 = por %p170, %p171
    %s173 = ssub.s32 %s13, %s20
    %p174 = scmp.eq.s32.totalorder %s173, 0
    %s176 = sadd.s32 %s175, 1
    %s177 = scalar_select %p174, %s175, %s176
    %p180 = pneg %p174
    %p181 = scmp.eq.s32.totalorder %s13, 3
    %p182 = por %p180, %p181
    %p183 = scmp.ne.s32.totalorder %s175, %s178
    %p184 = scmp.eq.s32.totalorder %s13, 0
    %p185 = por %p183, %p184
    %p186 = scmp.ne.s32.totalorder %s175, %s178
    %p187 = scmp.eq.s32.totalorder %s18, 3
    %p188 = por %p186, %p187
    %p189 = scmp.ne.s32.totalorder %s178, %s179
    %p190 = scmp.eq.s32.totalorder %s18, 0
    %p191 = por %p189, %p190
    %p192 = scmp.ne.s32.totalorder %s178, %s179
    %p193 = scmp.eq.s32.totalorder %s19, 3
    %p194 = por %p192, %p193
    %p196 = scmp.ne.s32.totalorder %s179, %s195
    %p197 = scmp.eq.s32.totalorder %s19, 0
    %p198 = por %p196, %p197
    %p199 = scmp.le.s32.totalorder 1, %s13
    %p200 = scmp.lt.s32.totalorder %s13, 5
    %p201 = pnand %p199, %p200
    %p202 = pneg %p201
    // Predicated region
    $region9: #{patch_deformation_mlp.3} parent=5 // pred_check
      _
    $region10: #{patch_deformation_mlp.3} parent=5 // pred_check_branch
      %204 = sbr.rel (%p201) target = $region12
    $region11: #{patch_deformation_mlp.3} parent=5 // pred_region
      %s205 = ssub.s32 %s13, 1
      // Predicated region
      $region13: #{patch_deformation_mlp.3} parent=11 // pred_check
        %p206 = pneg %p60
      $region14: #{patch_deformation_mlp.3} parent=11 // pred_check_branch
        %208 = sbr.rel (%p206) target = $region16
      $region15: #{patch_deformation_mlp.3} parent=11 // pred_region
        _
      $region16: #{patch_deformation_mlp.3} parent=11 // pred_fallthru
        _
      // Predicated region
      $region17: #{patch_deformation_mlp.3} parent=11 // pred_check
        %p209 = pneg %p81
      $region18: #{patch_deformation_mlp.3} parent=11 // pred_check_branch
        %211 = sbr.rel (%p209) target = $region20
      $region19: #{patch_deformation_mlp.3} parent=11 // pred_region
        _
      $region20: #{patch_deformation_mlp.3} parent=11 // pred_fallthru
        _
      // Predicated region
      $region21: #{patch_deformation_mlp.3} parent=11 // pred_check
        %p212 = pneg %p102
      $region22: #{patch_deformation_mlp.3} parent=11 // pred_check_branch
        %214 = sbr.rel (%p212) target = $region24
      $region23: #{patch_deformation_mlp.3} parent=11 // pred_region
        _
      $region24: #{patch_deformation_mlp.3} parent=11 // pred_fallthru
        _
      // Predicated region
      $region25: #{patch_deformation_mlp.3} parent=11 // pred_check
        %p215 = pneg %p123
      $region26: #{patch_deformation_mlp.3} parent=11 // pred_check_branch
        %217 = sbr.rel (%p215) target = $region28
      $region27: #{patch_deformation_mlp.3} parent=11 // pred_region
        _
      $region28: #{patch_deformation_mlp.3} parent=11 // pred_fallthru
        _
      // Predicated region
      $region29: #{patch_deformation_mlp.3} parent=11 // pred_check
        %p218 = pneg %p144
      $region30: #{patch_deformation_mlp.3} parent=11 // pred_check_branch
        %220 = sbr.rel (%p218) target = $region32
      $region31: #{patch_deformation_mlp.3} parent=11 // pred_region
        _
      $region32: #{patch_deformation_mlp.3} parent=11 // pred_fallthru
        _
      // Predicated region
      $region33: #{patch_deformation_mlp.3} parent=11 // pred_check
        %p221 = pneg %p165
      $region34: #{patch_deformation_mlp.3} parent=11 // pred_check_branch
        %223 = sbr.rel (%p221) target = $region36
      $region35: #{patch_deformation_mlp.3} parent=11 // pred_region
        _
      $region36: #{patch_deformation_mlp.3} parent=11 // pred_fallthru
        _
    $region12: #{patch_deformation_mlp.3} parent=5 // pred_fallthru
      _
    %p224 = scmp.lt.s32.totalorder %s13, 4
    // Predicated region
    $region37: #{patch_deformation_mlp.3} parent=5 // pred_check
      %p225 = pneg %p224
    $region38: #{patch_deformation_mlp.3} parent=5 // pred_check_branch
      %227 = sbr.rel (%p225) target = $region40
    $region39: #{patch_deformation_mlp.3} parent=5 // pred_region
      // Predicated region
      $region41: #{patch_deformation_mlp.3} parent=39 // pred_check
        %p228 = pneg %p33
      $region42: #{patch_deformation_mlp.3} parent=39 // pred_check_branch
        %230 = sbr.rel (%p228) target = $region44
      $region43: #{patch_deformation_mlp.3} parent=39 // pred_region
        %s231 = smul.u32 32, %s13
        %p232 = scmp.lt.s32.totalorder %s231, 127
        %s233 = scalar_select %p232, %s231, 127
        %s234 = smul.addr %s233, 8
        %s235 = scalar_lea.vmem %s0, %s234
        %s236 = smul.u32 32, %s13
      $region44: #{patch_deformation_mlp.3} parent=39 // pred_fallthru
        _
    $region40: #{patch_deformation_mlp.3} parent=5 // pred_fallthru
      _
    %p237 = scmp.le.s32.totalorder 1, %s13
    %p238 = scmp.lt.s32.totalorder %s13, 5
    %p239 = pnand %p237, %p238
    %p240 = pneg %p239
    // Predicated region
    $region45: #{patch_deformation_mlp.3} parent=5 // pred_check
      _
    $region46: #{patch_deformation_mlp.3} parent=5 // pred_check_branch
      %242 = sbr.rel (%p239) target = $region48
    $region47: #{patch_deformation_mlp.3} parent=5 // pred_region
      %s243 = ssub.s32 %s13, 1
      %s244 = smul.u32 32, %s18
      %p245 = scmp.lt.s32.totalorder %s244, 127
      %s246 = scalar_select %p245, %s244, 127
      %s247 = smul.addr %s246, 8
      %s248 = scalar_lea.vmem %s0, %s247
      %p249 = pneg %p39
      %p250 = pneg %p36
      %p251 = pneg %p60
      %p252 = pneg %p57
      %p253 = pneg %p81
      %p254 = pneg %p78
      %p255 = pneg %p102
      %p256 = pneg %p99
      %p257 = pneg %p123
      %p258 = pneg %p120
      %p259 = pneg %p144
      %p260 = pneg %p141
      %p261 = pneg %p165
      %p262 = pneg %p162
      %p263 = pneg %p191
      %p264 = pneg %p188
      %s265 = smul.u32 32, %s18
      %p266 = scmp.lt.s32.totalorder %s265, 127
      %s267 = scalar_select %p266, %s265, 127
      %s268 = smul.addr %s267, 8
      %s269 = scalar_lea.vmem %s7, %s268
      %s270 = smul.u32 32, %s18
      %p271 = scmp.lt.s32.totalorder %s270, 127
      %s272 = scalar_select %p271, %s270, 127
      %s273 = smul.addr %s272, 8
      %s274 = scalar_lea.vmem %s0, %s273
      %s275 = smul.u32 32, %s18
      %s276 = smul.u32 32, %s18
      %p277 = scmp.lt.s32.totalorder %s276, 127
      %s278 = scalar_select %p277, %s276, 127
      %s279 = smul.addr %s278, 8
      %s280 = scalar_lea.vmem %s7, %s279
      %s281 = smul.u32 32, %s18
      %v282 = vld [vmem:[%s274] sm:$0xff]
      %v283 = vld [vmem:[%s274 + $0x8] sm:$0xff]
      %v284 = vld [vmem:[%s274 + $0x10] sm:$0xff]
      %v285 = vld [vmem:[%s274 + $0x18] sm:$0xff]
      %v286 = vld [vmem:[%s274 + $0x20] sm:$0xff]
      %v287 = vld [vmem:[%s274 + $0x28] sm:$0xff]
      %v288 = vld [vmem:[%s274 + $0x30] sm:$0xff]
      %v289 = vld [vmem:[%s274 + $0x38] sm:$0xff]
      %v290 = vld [vmem:[%s274 + $0x40] sm:$0xff]
      %v291 = vld [vmem:[%s274 + $0x48] sm:$0xff]
      %v292 = vld [vmem:[%s274 + $0x50] sm:$0xff]
      %v293 = vld [vmem:[%s274 + $0x58] sm:$0xff]
      %v294 = vld [vmem:[%s274 + $0x60] sm:$0xff]
      %v295 = vld [vmem:[%s274 + $0x68] sm:$0xff]
      %v296 = vld [vmem:[%s274 + $0x70] sm:$0xff]
      %v297 = vld [vmem:[%s274 + $0x78] sm:$0xff]
      %v298 = vld [vmem:[%s274 + $0x80] sm:$0xff]
      %v299 = vld [vmem:[%s274 + $0x88] sm:$0xff]
      %v300 = vld [vmem:[%s274 + $0x90] sm:$0xff]
      %v301 = vld [vmem:[%s274 + $0x98] sm:$0xff]
      %v302 = vld [vmem:[%s274 + $0xa0] sm:$0xff]
      %v303 = vld [vmem:[%s274 + $0xa8] sm:$0xff]
      %v304 = vld [vmem:[%s274 + $0xb0] sm:$0xff]
      %v305 = vld [vmem:[%s274 + $0xb8] sm:$0xff]
      %v306 = vld [vmem:[%s274 + $0xc0] sm:$0xff]
      %v307 = vld [vmem:[%s274 + $0xc8] sm:$0xff]
      %v308 = vld [vmem:[%s274 + $0xd0] sm:$0xff]
      %v309 = vld [vmem:[%s274 + $0xd8] sm:$0xff]
      %v310 = vld [vmem:[%s274 + $0xe0] sm:$0xff]
      %v311 = vld [vmem:[%s274 + $0xe8] sm:$0xff]
      %v312 = vld [vmem:[%s274 + $0xf0] sm:$0xff]
      %v313 = vld [vmem:[%s274 + $0xf8] sm:$0xff]
      %v314 = vld [vmem:[%s1] sm:$0x3]
      %316 = vset.pattern.permute.xlu0 0
      %317 = vperm.xlu0 %316, %v282
      %v318 = vpop.permute.xlu0 %317
      %321 = vset.pattern.permute.xlu0 0
      %322 = vperm.xlu0 %321, %v283
      %v323 = vpop.permute.xlu0 %322
      %326 = vset.pattern.permute.xlu0 0
      %327 = vperm.xlu0 %326, %v284
      %v328 = vpop.permute.xlu0 %327
      %331 = vset.pattern.permute.xlu0 0
      %332 = vperm.xlu0 %331, %v285
      %v333 = vpop.permute.xlu0 %332
      %336 = vset.pattern.permute.xlu0 0
      %337 = vperm.xlu0 %336, %v286
      %v338 = vpop.permute.xlu0 %337
      %341 = vset.pattern.permute.xlu0 0
      %342 = vperm.xlu0 %341, %v287
      %v343 = vpop.permute.xlu0 %342
      %346 = vset.pattern.permute.xlu0 0
      %347 = vperm.xlu0 %346, %v288
      %v348 = vpop.permute.xlu0 %347
      %351 = vset.pattern.permute.xlu0 0
      %352 = vperm.xlu0 %351, %v289
      %v353 = vpop.permute.xlu0 %352
      %356 = vset.pattern.permute.xlu0 0
      %357 = vperm.xlu0 %356, %v290
      %v358 = vpop.permute.xlu0 %357
      %361 = vset.pattern.permute.xlu0 0
      %362 = vperm.xlu0 %361, %v291
      %v363 = vpop.permute.xlu0 %362
      %366 = vset.pattern.permute.xlu0 0
      %367 = vperm.xlu0 %366, %v292
      %v368 = vpop.permute.xlu0 %367
      %371 = vset.pattern.permute.xlu0 0
      %372 = vperm.xlu0 %371, %v293
      %v373 = vpop.permute.xlu0 %372
      %376 = vset.pattern.permute.xlu0 0
      %377 = vperm.xlu0 %376, %v294
      %v378 = vpop.permute.xlu0 %377
      %381 = vset.pattern.permute.xlu0 0
      %382 = vperm.xlu0 %381, %v295
      %v383 = vpop.permute.xlu0 %382
      %386 = vset.pattern.permute.xlu0 0
      %387 = vperm.xlu0 %386, %v296
      %v388 = vpop.permute.xlu0 %387
      %391 = vset.pattern.permute.xlu0 0
      %392 = vperm.xlu0 %391, %v297
      %v393 = vpop.permute.xlu0 %392
      %396 = vset.pattern.permute.xlu0 0
      %397 = vperm.xlu0 %396, %v298
      %v398 = vpop.permute.xlu0 %397
      %401 = vset.pattern.permute.xlu0 0
      %402 = vperm.xlu0 %401, %v299
      %v403 = vpop.permute.xlu0 %402
      %406 = vset.pattern.permute.xlu0 0
      %407 = vperm.xlu0 %406, %v300
      %v408 = vpop.permute.xlu0 %407
      %411 = vset.pattern.permute.xlu0 0
      %412 = vperm.xlu0 %411, %v301
      %v413 = vpop.permute.xlu0 %412
      %416 = vset.pattern.permute.xlu0 0
      %417 = vperm.xlu0 %416, %v302
      %v418 = vpop.permute.xlu0 %417
      %421 = vset.pattern.permute.xlu0 0
      %422 = vperm.xlu0 %421, %v303
      %v423 = vpop.permute.xlu0 %422
      %426 = vset.pattern.permute.xlu0 0
      %427 = vperm.xlu0 %426, %v304
      %v428 = vpop.permute.xlu0 %427
      %431 = vset.pattern.permute.xlu0 0
      %432 = vperm.xlu0 %431, %v305
      %v433 = vpop.permute.xlu0 %432
      %436 = vset.pattern.permute.xlu0 0
      %437 = vperm.xlu0 %436, %v306
      %v438 = vpop.permute.xlu0 %437
      %441 = vset.pattern.permute.xlu0 0
      %442 = vperm.xlu0 %441, %v307
      %v443 = vpop.permute.xlu0 %442
      %446 = vset.pattern.permute.xlu0 0
      %447 = vperm.xlu0 %446, %v308
      %v448 = vpop.permute.xlu0 %447
      %451 = vset.pattern.permute.xlu0 0
      %452 = vperm.xlu0 %451, %v309
      %v453 = vpop.permute.xlu0 %452
      %456 = vset.pattern.permute.xlu0 0
      %457 = vperm.xlu0 %456, %v310
      %v458 = vpop.permute.xlu0 %457
      %461 = vset.pattern.permute.xlu0 0
      %462 = vperm.xlu0 %461, %v311
      %v463 = vpop.permute.xlu0 %462
      %466 = vset.pattern.permute.xlu0 0
      %467 = vperm.xlu0 %466, %v312
      %v468 = vpop.permute.xlu0 %467
      %471 = vset.pattern.permute.xlu0 0
      %472 = vperm.xlu0 %471, %v313
      %v473 = vpop.permute.xlu0 %472
      %v475 = vlaneseq
      %v476 = vshrl.u32 %v475, 7
      %v477 = vsub.s32 0, %v476
      %v478 = vrot.slane %v314, %v477
      %v479 = vmul.f32 %v318, %v478
      %v480 = vmul.f32 %v323, %v478
      %v481 = vmul.f32 %v328, %v478
      %v482 = vmul.f32 %v333, %v478
      %v483 = vmul.f32 %v338, %v478
      %v484 = vmul.f32 %v343, %v478
      %v485 = vmul.f32 %v348, %v478
      %v486 = vmul.f32 %v353, %v478
      %v487 = vmul.f32 %v358, %v478
      %v488 = vmul.f32 %v363, %v478
      %v489 = vmul.f32 %v368, %v478
      %v490 = vmul.f32 %v373, %v478
      %v491 = vmul.f32 %v378, %v478
      %v492 = vmul.f32 %v383, %v478
      %v493 = vmul.f32 %v388, %v478
      %v494 = vmul.f32 %v393, %v478
      %v495 = vmul.f32 %v398, %v478
      %v496 = vmul.f32 %v403, %v478
      %v497 = vmul.f32 %v408, %v478
      %v498 = vmul.f32 %v413, %v478
      %v499 = vmul.f32 %v418, %v478
      %v500 = vmul.f32 %v423, %v478
      %v501 = vmul.f32 %v428, %v478
      %v502 = vmul.f32 %v433, %v478
      %v503 = vmul.f32 %v438, %v478
      %v504 = vmul.f32 %v443, %v478
      %v505 = vmul.f32 %v448, %v478
      %v506 = vmul.f32 %v453, %v478
      %v507 = vmul.f32 %v458, %v478
      %v508 = vmul.f32 %v463, %v478
      %v509 = vmul.f32 %v468, %v478
      %v510 = vmul.f32 %v473, %v478
      %511 = vset.pattern.permute.xlu0 1
      %512 = vperm.xlu0 %511, %v282
      %v513 = vpop.permute.xlu0 %512
      %515 = vset.pattern.permute.xlu0 1
      %516 = vperm.xlu0 %515, %v283
      %v517 = vpop.permute.xlu0 %516
      %519 = vset.pattern.permute.xlu0 1
      %520 = vperm.xlu0 %519, %v284
      %v521 = vpop.permute.xlu0 %520
      %523 = vset.pattern.permute.xlu0 1
      %524 = vperm.xlu0 %523, %v285
      %v525 = vpop.permute.xlu0 %524
      %527 = vset.pattern.permute.xlu0 1
      %528 = vperm.xlu0 %527, %v286
      %v529 = vpop.permute.xlu0 %528
      %531 = vset.pattern.permute.xlu0 1
      %532 = vperm.xlu0 %531, %v287
      %v533 = vpop.permute.xlu0 %532
      %535 = vset.pattern.permute.xlu0 1
      %536 = vperm.xlu0 %535, %v288
      %v537 = vpop.permute.xlu0 %536
      %539 = vset.pattern.permute.xlu0 1
      %540 = vperm.xlu0 %539, %v289
      %v541 = vpop.permute.xlu0 %540
      %543 = vset.pattern.permute.xlu0 1
      %544 = vperm.xlu0 %543, %v290
      %v545 = vpop.permute.xlu0 %544
      %547 = vset.pattern.permute.xlu0 1
      %548 = vperm.xlu0 %547, %v291
      %v549 = vpop.permute.xlu0 %548
      %551 = vset.pattern.permute.xlu0 1
      %552 = vperm.xlu0 %551, %v292
      %v553 = vpop.permute.xlu0 %552
      %555 = vset.pattern.permute.xlu0 1
      %556 = vperm.xlu0 %555, %v293
      %v557 = vpop.permute.xlu0 %556
      %559 = vset.pattern.permute.xlu0 1
      %560 = vperm.xlu0 %559, %v294
      %v561 = vpop.permute.xlu0 %560
      %563 = vset.pattern.permute.xlu0 1
      %564 = vperm.xlu0 %563, %v295
      %v565 = vpop.permute.xlu0 %564
      %567 = vset.pattern.permute.xlu0 1
      %568 = vperm.xlu0 %567, %v296
      %v569 = vpop.permute.xlu0 %568
      %571 = vset.pattern.permute.xlu0 1
      %572 = vperm.xlu0 %571, %v297
      %v573 = vpop.permute.xlu0 %572
      %575 = vset.pattern.permute.xlu0 1
      %576 = vperm.xlu0 %575, %v298
      %v577 = vpop.permute.xlu0 %576
      %579 = vset.pattern.permute.xlu0 1
      %580 = vperm.xlu0 %579, %v299
      %v581 = vpop.permute.xlu0 %580
      %583 = vset.pattern.permute.xlu0 1
      %584 = vperm.xlu0 %583, %v300
      %v585 = vpop.permute.xlu0 %584
      %587 = vset.pattern.permute.xlu0 1
      %588 = vperm.xlu0 %587, %v301
      %v589 = vpop.permute.xlu0 %588
      %591 = vset.pattern.permute.xlu0 1
      %592 = vperm.xlu0 %591, %v302
      %v593 = vpop.permute.xlu0 %592
      %595 = vset.pattern.permute.xlu0 1
      %596 = vperm.xlu0 %595, %v303
      %v597 = vpop.permute.xlu0 %596
      %599 = vset.pattern.permute.xlu0 1
      %600 = vperm.xlu0 %599, %v304
      %v601 = vpop.permute.xlu0 %600
      %603 = vset.pattern.permute.xlu0 1
      %604 = vperm.xlu0 %603, %v305
      %v605 = vpop.permute.xlu0 %604
      %607 = vset.pattern.permute.xlu0 1
      %608 = vperm.xlu0 %607, %v306
      %v609 = vpop.permute.xlu0 %608
      %611 = vset.pattern.permute.xlu0 1
      %612 = vperm.xlu0 %611, %v307
      %v613 = vpop.permute.xlu0 %612
      %615 = vset.pattern.permute.xlu0 1
      %616 = vperm.xlu0 %615, %v308
      %v617 = vpop.permute.xlu0 %616
      %619 = vset.pattern.permute.xlu0 1
      %620 = vperm.xlu0 %619, %v309
      %v621 = vpop.permute.xlu0 %620
      %623 = vset.pattern.permute.xlu0 1
      %624 = vperm.xlu0 %623, %v310
      %v625 = vpop.permute.xlu0 %624
      %627 = vset.pattern.permute.xlu0 1
      %628 = vperm.xlu0 %627, %v311
      %v629 = vpop.permute.xlu0 %628
      %631 = vset.pattern.permute.xlu0 1
      %632 = vperm.xlu0 %631, %v312
      %v633 = vpop.permute.xlu0 %632
      %635 = vset.pattern.permute.xlu0 1
      %636 = vperm.xlu0 %635, %v313
      %v637 = vpop.permute.xlu0 %636
      %v639 = vlaneseq
      %v640 = vshrl.u32 %v639, 7
      %v641 = vsub.s32 1, %v640
      %v642 = vrot.slane %v314, %v641
      %v643 = vmul.f32 %v513, %v642
      %v644 = vmul.f32 %v517, %v642
      %v645 = vmul.f32 %v521, %v642
      %v646 = vmul.f32 %v525, %v642
      %v647 = vmul.f32 %v529, %v642
      %v648 = vmul.f32 %v533, %v642
      %v649 = vmul.f32 %v537, %v642
      %v650 = vmul.f32 %v541, %v642
      %v651 = vmul.f32 %v545, %v642
      %v652 = vmul.f32 %v549, %v642
      %v653 = vmul.f32 %v553, %v642
      %v654 = vmul.f32 %v557, %v642
      %v655 = vmul.f32 %v561, %v642
      %v656 = vmul.f32 %v565, %v642
      %v657 = vmul.f32 %v569, %v642
      %v658 = vmul.f32 %v573, %v642
      %v659 = vmul.f32 %v577, %v642
      %v660 = vmul.f32 %v581, %v642
      %v661 = vmul.f32 %v585, %v642
      %v662 = vmul.f32 %v589, %v642
      %v663 = vmul.f32 %v593, %v642
      %v664 = vmul.f32 %v597, %v642
      %v665 = vmul.f32 %v601, %v642
      %v666 = vmul.f32 %v605, %v642
      %v667 = vmul.f32 %v609, %v642
      %v668 = vmul.f32 %v613, %v642
      %v669 = vmul.f32 %v617, %v642
      %v670 = vmul.f32 %v621, %v642
      %v671 = vmul.f32 %v625, %v642
      %v672 = vmul.f32 %v629, %v642
      %v673 = vmul.f32 %v633, %v642
      %v674 = vmul.f32 %v637, %v642
      %v675 = vadd.f32 %v479, %v643
      %v676 = vadd.f32 %v480, %v644
      %v677 = vadd.f32 %v481, %v645
      %v678 = vadd.f32 %v482, %v646
      %v679 = vadd.f32 %v483, %v647
      %v680 = vadd.f32 %v484, %v648
      %v681 = vadd.f32 %v485, %v649
      %v682 = vadd.f32 %v486, %v650
      %v683 = vadd.f32 %v487, %v651
      %v684 = vadd.f32 %v488, %v652
      %v685 = vadd.f32 %v489, %v653
      %v686 = vadd.f32 %v490, %v654
      %v687 = vadd.f32 %v491, %v655
      %v688 = vadd.f32 %v492, %v656
      %v689 = vadd.f32 %v493, %v657
      %v690 = vadd.f32 %v494, %v658
      %v691 = vadd.f32 %v495, %v659
      %v692 = vadd.f32 %v496, %v660
      %v693 = vadd.f32 %v497, %v661
      %v694 = vadd.f32 %v498, %v662
      %v695 = vadd.f32 %v499, %v663
      %v696 = vadd.f32 %v500, %v664
      %v697 = vadd.f32 %v501, %v665
      %v698 = vadd.f32 %v502, %v666
      %v699 = vadd.f32 %v503, %v667
      %v700 = vadd.f32 %v504, %v668
      %v701 = vadd.f32 %v505, %v669
      %v702 = vadd.f32 %v506, %v670
      %v703 = vadd.f32 %v507, %v671
      %v704 = vadd.f32 %v508, %v672
      %v705 = vadd.f32 %v509, %v673
      %v706 = vadd.f32 %v510, %v674
      %v707 = vld [vmem:[%s2] sm:$0x1]
      %v709 = vlaneseq
      %v710 = vshrl.u32 %v709, 7
      %v711 = vsub.s32 0, %v710
      %v712 = vrot.slane %v707, %v711
      %v714 = vadd.f32 %v675, %v712
      %v715 = vadd.f32 %v676, %v712
      %v716 = vadd.f32 %v677, %v712
      %v717 = vadd.f32 %v678, %v712
      %v718 = vadd.f32 %v679, %v712
      %v719 = vadd.f32 %v680, %v712
      %v720 = vadd.f32 %v681, %v712
      %v721 = vadd.f32 %v682, %v712
      %v722 = vadd.f32 %v683, %v712
      %v723 = vadd.f32 %v684, %v712
      %v724 = vadd.f32 %v685, %v712
      %v725 = vadd.f32 %v686, %v712
      %v726 = vadd.f32 %v687, %v712
      %v727 = vadd.f32 %v688, %v712
      %v728 = vadd.f32 %v689, %v712
      %v729 = vadd.f32 %v690, %v712
      %v730 = vadd.f32 %v691, %v712
      %v731 = vadd.f32 %v692, %v712
      %v732 = vadd.f32 %v693, %v712
      %v733 = vadd.f32 %v694, %v712
      %v734 = vadd.f32 %v695, %v712
      %v735 = vadd.f32 %v696, %v712
      %v736 = vadd.f32 %v697, %v712
      %v737 = vadd.f32 %v698, %v712
      %v738 = vadd.f32 %v699, %v712
      %v739 = vadd.f32 %v700, %v712
      %v740 = vadd.f32 %v701, %v712
      %v741 = vadd.f32 %v702, %v712
      %v742 = vadd.f32 %v703, %v712
      %v743 = vadd.f32 %v704, %v712
      %v744 = vadd.f32 %v705, %v712
      %v745 = vadd.f32 %v706, %v712
      %v746 = vmax.f32 %v714, 0.0
      %v747 = vmax.f32 %v715, 0.0
      %v748 = vmax.f32 %v716, 0.0
      %v749 = vmax.f32 %v717, 0.0
      %v750 = vmax.f32 %v718, 0.0
      %v751 = vmax.f32 %v719, 0.0
      %v752 = vmax.f32 %v720, 0.0
      %v753 = vmax.f32 %v721, 0.0
      %v754 = vmax.f32 %v722, 0.0
      %v755 = vmax.f32 %v723, 0.0
      %v756 = vmax.f32 %v724, 0.0
      %v757 = vmax.f32 %v725, 0.0
      %v758 = vmax.f32 %v726, 0.0
      %v759 = vmax.f32 %v727, 0.0
      %v760 = vmax.f32 %v728, 0.0
      %v761 = vmax.f32 %v729, 0.0
      %v762 = vmax.f32 %v730, 0.0
      %v763 = vmax.f32 %v731, 0.0
      %v764 = vmax.f32 %v732, 0.0
      %v765 = vmax.f32 %v733, 0.0
      %v766 = vmax.f32 %v734, 0.0
      %v767 = vmax.f32 %v735, 0.0
      %v768 = vmax.f32 %v736, 0.0
      %v769 = vmax.f32 %v737, 0.0
      %v770 = vmax.f32 %v738, 0.0
      %v771 = vmax.f32 %v739, 0.0
      %v772 = vmax.f32 %v740, 0.0
      %v773 = vmax.f32 %v741, 0.0
      %v774 = vmax.f32 %v742, 0.0
      %v775 = vmax.f32 %v743, 0.0
      %v776 = vmax.f32 %v744, 0.0
      %v777 = vmax.f32 %v745, 0.0
      %v778 = vld [vmem:[%s3] sm:$0xff]
      %v779 = vld [vmem:[%s3 + $0x8] sm:$0xff]
      %v780 = vld [vmem:[%s3 + $0x10] sm:$0xff]
      %v781 = vld [vmem:[%s3 + $0x18] sm:$0xff]
      %v782 = vld [vmem:[%s3 + $0x20] sm:$0xff]
      %v783 = vld [vmem:[%s3 + $0x28] sm:$0xff]
      %v784 = vld [vmem:[%s3 + $0x30] sm:$0xff]
      %v785 = vld [vmem:[%s3 + $0x38] sm:$0xff]
      %v786 = vld [vmem:[%s3 + $0x40] sm:$0xff]
      %v787 = vld [vmem:[%s3 + $0x48] sm:$0xff]
      %v788 = vld [vmem:[%s3 + $0x50] sm:$0xff]
      %v789 = vld [vmem:[%s3 + $0x58] sm:$0xff]
      %v790 = vld [vmem:[%s3 + $0x60] sm:$0xff]
      %v791 = vld [vmem:[%s3 + $0x68] sm:$0xff]
      %v792 = vld [vmem:[%s3 + $0x70] sm:$0xff]
      %v793 = vld [vmem:[%s3 + $0x78] sm:$0xff]
      %v794 = vld [vmem:[%s4] sm:$0x1]
      %v796 = vlaneseq
      %v797 = vshrl.u32 %v796, 7
      %v798 = vsub.s32 0, %v797
      %v799 = vrot.slane %v794, %v798
      %801 = vmatprep.subr.mxu0 0.0
      %802 = vmatpush1.msra.mxu0 %v778
      %803 = vmatprep.subr.mxu0 0.0
      %804 = vmatpush1.msra.mxu0 %v779
      %805 = vmatprep.subr.mxu0 0.0
      %806 = vmatpush1.msra.mxu0 %v780
      %807 = vmatprep.subr.mxu0 0.0
      %808 = vmatpush1.msra.mxu0 %v781
      %809 = vmatprep.subr.mxu0 0.0
      %810 = vmatpush1.msra.mxu0 %v782
      %811 = vmatprep.subr.mxu0 0.0
      %812 = vmatpush1.msra.mxu0 %v783
      %813 = vmatprep.subr.mxu0 0.0
      %814 = vmatpush1.msra.mxu0 %v784
      %815 = vmatprep.subr.mxu0 0.0
      %816 = vmatpush1.msra.mxu0 %v785
      %817 = vmatprep.subr.mxu0 0.0
      %818 = vmatpush1.msra.mxu0 %v786
      %819 = vmatprep.subr.mxu0 0.0
      %820 = vmatpush1.msra.mxu0 %v787
      %821 = vmatprep.subr.mxu0 0.0
      %822 = vmatpush1.msra.mxu0 %v788
      %823 = vmatprep.subr.mxu0 0.0
      %824 = vmatpush1.msra.mxu0 %v789
      %825 = vmatprep.subr.mxu0 0.0
      %826 = vmatpush1.msra.mxu0 %v790
      %827 = vmatprep.subr.mxu0 0.0
      %828 = vmatpush1.msra.mxu0 %v791
      %829 = vmatprep.subr.mxu0 0.0
      %830 = vmatpush1.msra.mxu0 %v792
      %831 = vmatprep.subr.mxu0 0.0
      %832 = vmatpush1.msra.mxu0 %v793
      %833 = vmatprep.subr.mxu0 0.0
      %834 = vmatpush1.msra.mxu0 0.0
      %835 = vmatprep.subr.mxu0 0.0
      %836 = vmatpush1.msra.mxu0 0.0
      %837 = vmatprep.subr.mxu0 0.0
      %838 = vmatpush1.msra.mxu0 0.0
      %839 = vmatprep.subr.mxu0 0.0
      %840 = vmatpush1.msra.mxu0 0.0
      %841 = vmatprep.subr.mxu0 0.0
      %842 = vmatpush1.msra.mxu0 0.0
      %843 = vmatprep.subr.mxu0 0.0
      %844 = vmatpush1.msra.mxu0 0.0
      %845 = vmatprep.subr.mxu0 0.0
      %846 = vmatpush1.msra.mxu0 0.0
      %847 = vmatprep.subr.mxu0 0.0
      %848 = vmatpush1.msra.mxu0 0.0
      %849 = vmatprep.subr.mxu0 0.0
      %850 = vmatpush1.msra.mxu0 0.0
      %851 = vmatprep.subr.mxu0 0.0
      %852 = vmatpush1.msra.mxu0 0.0
      %853 = vmatprep.subr.mxu0 0.0
      %854 = vmatpush1.msra.mxu0 0.0
      %855 = vmatprep.subr.mxu0 0.0
      %856 = vmatpush1.msra.mxu0 0.0
      %857 = vmatprep.subr.mxu0 0.0
      %858 = vmatpush1.msra.mxu0 0.0
      %859 = vmatprep.subr.mxu0 0.0
      %860 = vmatpush1.msra.mxu0 0.0
      %861 = vmatprep.subr.mxu0 0.0
      %862 = vmatpush1.msra.mxu0 0.0
      %863 = vmatprep.subr.mxu0 0.0
      %864 = vmatpush1.msra.mxu0 0.0
      %865 = vmatprep.mubr.f32.mxu0 0.0
      %866 = vmatmul.mubr.f32.gmra.mrb[0].mxu0 %v746
      %v867 = vpop.f32.mrb[0].mxu0
      %v868 = vadd.f32 %v799, %v867
      %v869 = vpop.f32.mrb[0].mxu0
      %870 = vmatprep.mubr.f32.mxu0 0.0
      %871 = vmatmul.mubr.f32.gmra.mrb[0].mxu0 %v747
      %v872 = vpop.f32.mrb[0].mxu0
      %v873 = vadd.f32 %v799, %v872
      %v874 = vpop.f32.mrb[0].mxu0
      %875 = vmatprep.mubr.f32.mxu0 0.0
      %876 = vmatmul.mubr.f32.gmra.mrb[0].mxu0 %v748
      %v877 = vpop.f32.mrb[0].mxu0
      %v878 = vadd.f32 %v799, %v877
      %v879 = vpop.f32.mrb[0].mxu0
      %880 = vmatprep.mubr.f32.mxu0 0.0
      %881 = vmatmul.mubr.f32.gmra.mrb[0].mxu0 %v749
      %v882 = vpop.f32.mrb[0].mxu0
      %v883 = vadd.f32 %v799, %v882
      %v884 = vpop.f32.mrb[0].mxu0
      %885 = vmatprep.mubr.f32.mxu0 0.0
      %886 = vmatmul.mubr.f32.gmra.mrb[0].mxu0 %v750
      %v887 = vpop.f32.mrb[0].mxu0
      %v888 = vadd.f32 %v799, %v887
      %v889 = vpop.f32.mrb[0].mxu0
      %890 = vmatprep.mubr.f32.mxu0 0.0
      %891 = vmatmul.mubr.f32.gmra.mrb[0].mxu0 %v751
      %v892 = vpop.f32.mrb[0].mxu0
      %v893 = vadd.f32 %v799, %v892
      %v894 = vpop.f32.mrb[0].mxu0
      %895 = vmatprep.mubr.f32.mxu0 0.0
      %896 = vmatmul.mubr.f32.gmra.mrb[0].mxu0 %v752
      %v897 = vpop.f32.mrb[0].mxu0
      %v898 = vadd.f32 %v799, %v897
      %v899 = vpop.f32.mrb[0].mxu0
      %900 = vmatprep.mubr.f32.mxu0 0.0
      %901 = vmatmul.mubr.f32.gmra.mrb[0].mxu0 %v753
      %v902 = vpop.f32.mrb[0].mxu0
      %v903 = vadd.f32 %v799, %v902
      %v904 = vpop.f32.mrb[0].mxu0
      %905 = vmatprep.mubr.f32.mxu0 0.0
      %906 = vmatmul.mubr.f32.gmra.mrb[0].mxu0 %v754
      %v907 = vpop.f32.mrb[0].mxu0
      %v908 = vadd.f32 %v799, %v907
      %v909 = vpop.f32.mrb[0].mxu0
      %910 = vmatprep.mubr.f32.mxu0 0.0
      %911 = vmatmul.mubr.f32.gmra.mrb[0].mxu0 %v755
      %v912 = vpop.f32.mrb[0].mxu0
      %v913 = vadd.f32 %v799, %v912
      %v914 = vpop.f32.mrb[0].mxu0
      %915 = vmatprep.mubr.f32.mxu0 0.0
      %916 = vmatmul.mubr.f32.gmra.mrb[0].mxu0 %v756
      %v917 = vpop.f32.mrb[0].mxu0
      %v918 = vadd.f32 %v799, %v917
      %v919 = vpop.f32.mrb[0].mxu0
      %920 = vmatprep.mubr.f32.mxu0 0.0
      %921 = vmatmul.mubr.f32.gmra.mrb[0].mxu0 %v757
      %v922 = vpop.f32.mrb[0].mxu0
      %v923 = vadd.f32 %v799, %v922
      %v924 = vpop.f32.mrb[0].mxu0
      %925 = vmatprep.mubr.f32.mxu0 0.0
      %926 = vmatmul.mubr.f32.gmra.mrb[0].mxu0 %v758
      %v927 = vpop.f32.mrb[0].mxu0
      %v928 = vadd.f32 %v799, %v927
      %v929 = vpop.f32.mrb[0].mxu0
      %930 = vmatprep.mubr.f32.mxu0 0.0
      %931 = vmatmul.mubr.f32.gmra.mrb[0].mxu0 %v759
      %v932 = vpop.f32.mrb[0].mxu0
      %v933 = vadd.f32 %v799, %v932
      %v934 = vpop.f32.mrb[0].mxu0
      %935 = vmatprep.mubr.f32.mxu0 0.0
      %936 = vmatmul.mubr.f32.gmra.mrb[0].mxu0 %v760
      %v937 = vpop.f32.mrb[0].mxu0
      %v938 = vadd.f32 %v799, %v937
      %v939 = vpop.f32.mrb[0].mxu0
      %940 = vmatprep.mubr.f32.mxu0 0.0
      %941 = vmatmul.mubr.f32.gmra.mrb[0].mxu0 %v761
      %v942 = vpop.f32.mrb[0].mxu0
      %v943 = vadd.f32 %v799, %v942
      %v944 = vpop.f32.mrb[0].mxu0
      %945 = vmatprep.mubr.f32.mxu0 0.0
      %946 = vmatmul.mubr.f32.gmra.mrb[0].mxu0 %v762
      %v947 = vpop.f32.mrb[0].mxu0
      %v948 = vadd.f32 %v799, %v947
      %v949 = vpop.f32.mrb[0].mxu0
      %950 = vmatprep.mubr.f32.mxu0 0.0
      %951 = vmatmul.mubr.f32.gmra.mrb[0].mxu0 %v763
      %v952 = vpop.f32.mrb[0].mxu0
      %v953 = vadd.f32 %v799, %v952
      %v954 = vpop.f32.mrb[0].mxu0
      %955 = vmatprep.mubr.f32.mxu0 0.0
      %956 = vmatmul.mubr.f32.gmra.mrb[0].mxu0 %v764
      %v957 = vpop.f32.mrb[0].mxu0
      %v958 = vadd.f32 %v799, %v957
      %v959 = vpop.f32.mrb[0].mxu0
      %960 = vmatprep.mubr.f32.mxu0 0.0
      %961 = vmatmul.mubr.f32.gmra.mrb[0].mxu0 %v765
      %v962 = vpop.f32.mrb[0].mxu0
      %v963 = vadd.f32 %v799, %v962
      %v964 = vpop.f32.mrb[0].mxu0
      %965 = vmatprep.mubr.f32.mxu0 0.0
      %966 = vmatmul.mubr.f32.gmra.mrb[0].mxu0 %v766
      %v967 = vpop.f32.mrb[0].mxu0
      %v968 = vadd.f32 %v799, %v967
      %v969 = vpop.f32.mrb[0].mxu0
      %970 = vmatprep.mubr.f32.mxu0 0.0
      %971 = vmatmul.mubr.f32.gmra.mrb[0].mxu0 %v767
      %v972 = vpop.f32.mrb[0].mxu0
      %v973 = vadd.f32 %v799, %v972
      %v974 = vpop.f32.mrb[0].mxu0
      %975 = vmatprep.mubr.f32.mxu0 0.0
      %976 = vmatmul.mubr.f32.gmra.mrb[0].mxu0 %v768
      %v977 = vpop.f32.mrb[0].mxu0
      %v978 = vadd.f32 %v799, %v977
      %v979 = vpop.f32.mrb[0].mxu0
      %980 = vmatprep.mubr.f32.mxu0 0.0
      %981 = vmatmul.mubr.f32.gmra.mrb[0].mxu0 %v769
      %v982 = vpop.f32.mrb[0].mxu0
      %v983 = vadd.f32 %v799, %v982
      %v984 = vpop.f32.mrb[0].mxu0
      %985 = vmatprep.mubr.f32.mxu0 0.0
      %986 = vmatmul.mubr.f32.gmra.mrb[0].mxu0 %v770
      %v987 = vpop.f32.mrb[0].mxu0
      %v988 = vadd.f32 %v799, %v987
      %v989 = vpop.f32.mrb[0].mxu0
      %990 = vmatprep.mubr.f32.mxu0 0.0
      %991 = vmatmul.mubr.f32.gmra.mrb[0].mxu0 %v771
      %v992 = vpop.f32.mrb[0].mxu0
      %v993 = vadd.f32 %v799, %v992
      %v994 = vpop.f32.mrb[0].mxu0
      %995 = vmatprep.mubr.f32.mxu0 0.0
      %996 = vmatmul.mubr.f32.gmra.mrb[0].mxu0 %v772
      %v997 = vpop.f32.mrb[0].mxu0
      %v998 = vadd.f32 %v799, %v997
      %v999 = vpop.f32.mrb[0].mxu0
      %1000 = vmatprep.mubr.f32.mxu0 0.0
      %1001 = vmatmul.mubr.f32.gmra.mrb[0].mxu0 %v773
      %v1002 = vpop.f32.mrb[0].mxu0
      %v1003 = vadd.f32 %v799, %v1002
      %v1004 = vpop.f32.mrb[0].mxu0
      %1005 = vmatprep.mubr.f32.mxu0 0.0
      %1006 = vmatmul.mubr.f32.gmra.mrb[0].mxu0 %v774
      %v1007 = vpop.f32.mrb[0].mxu0
      %v1008 = vadd.f32 %v799, %v1007
      %v1009 = vpop.f32.mrb[0].mxu0
      %1010 = vmatprep.mubr.f32.mxu0 0.0
      %1011 = vmatmul.mubr.f32.gmra.mrb[0].mxu0 %v775
      %v1012 = vpop.f32.mrb[0].mxu0
      %v1013 = vadd.f32 %v799, %v1012
      %v1014 = vpop.f32.mrb[0].mxu0
      %1015 = vmatprep.mubr.f32.mxu0 0.0
      %1016 = vmatmul.mubr.f32.gmra.mrb[0].mxu0 %v776
      %v1017 = vpop.f32.mrb[0].mxu0
      %v1018 = vadd.f32 %v799, %v1017
      %v1019 = vpop.f32.mrb[0].mxu0
      %1020 = vmatprep.mubr.f32.mxu0 0.0
      %1021 = vmatmul.mubr.f32.gmra.mrb[0].mxu0 %v777
      %v1022 = vpop.f32.mrb[0].mxu0
      %v1023 = vadd.f32 %v799, %v1022
      %v1024 = vpop.f32.mrb[0].mxu0
      %1025 = vdwg.mxu0
      %v1026 = vmax.f32 %v868, 0.0
      %v1027 = vmax.f32 %v873, 0.0
      %v1028 = vmax.f32 %v878, 0.0
      %v1029 = vmax.f32 %v883, 0.0
      %v1030 = vmax.f32 %v888, 0.0
      %v1031 = vmax.f32 %v893, 0.0
      %v1032 = vmax.f32 %v898, 0.0
      %v1033 = vmax.f32 %v903, 0.0
      %v1034 = vmax.f32 %v908, 0.0
      %v1035 = vmax.f32 %v913, 0.0
      %v1036 = vmax.f32 %v918, 0.0
      %v1037 = vmax.f32 %v923, 0.0
      %v1038 = vmax.f32 %v928, 0.0
      %v1039 = vmax.f32 %v933, 0.0
      %v1040 = vmax.f32 %v938, 0.0
      %v1041 = vmax.f32 %v943, 0.0
      %v1042 = vmax.f32 %v948, 0.0
      %v1043 = vmax.f32 %v953, 0.0
      %v1044 = vmax.f32 %v958, 0.0
      %v1045 = vmax.f32 %v963, 0.0
      %v1046 = vmax.f32 %v968, 0.0
      %v1047 = vmax.f32 %v973, 0.0
      %v1048 = vmax.f32 %v978, 0.0
      %v1049 = vmax.f32 %v983, 0.0
      %v1050 = vmax.f32 %v988, 0.0
      %v1051 = vmax.f32 %v993, 0.0
      %v1052 = vmax.f32 %v998, 0.0
      %v1053 = vmax.f32 %v1003, 0.0
      %v1054 = vmax.f32 %v1008, 0.0
      %v1055 = vmax.f32 %v1013, 0.0
      %v1056 = vmax.f32 %v1018, 0.0
      %v1057 = vmax.f32 %v1023, 0.0
      %v1058 = vld [vmem:[%s5] sm:$0xff]
      %v1059 = vld [vmem:[%s5 + $0x8] sm:$0xff]
      %v1060 = vld [vmem:[%s5 + $0x10] sm:$0xff]
      %v1061 = vld [vmem:[%s5 + $0x18] sm:$0xff]
      %v1062 = vld [vmem:[%s5 + $0x20] sm:$0xff]
      %v1063 = vld [vmem:[%s5 + $0x28] sm:$0xff]
      %v1064 = vld [vmem:[%s5 + $0x30] sm:$0xff]
      %v1065 = vld [vmem:[%s5 + $0x38] sm:$0xff]
      %v1066 = vld [vmem:[%s5 + $0x40] sm:$0xff]
      %v1067 = vld [vmem:[%s5 + $0x48] sm:$0xff]
      %v1068 = vld [vmem:[%s5 + $0x50] sm:$0xff]
      %v1069 = vld [vmem:[%s5 + $0x58] sm:$0xff]
      %v1070 = vld [vmem:[%s5 + $0x60] sm:$0xff]
      %v1071 = vld [vmem:[%s5 + $0x68] sm:$0xff]
      %v1072 = vld [vmem:[%s5 + $0x70] sm:$0xff]
      %v1073 = vld [vmem:[%s5 + $0x78] sm:$0xff]
      %v1074 = vld [vmem:[%s6] sm:$0x1]
      %v1076 = vlaneseq
      %v1077 = vshrl.u32 %v1076, 7
      %v1078 = vsub.s32 0, %v1077
      %v1079 = vrot.slane %v1074, %v1078
      %1081 = vmatprep.subr.mxu0 0.0
      %1082 = vmatpush1.msra.mxu0 %v1058
      %1083 = vmatprep.subr.mxu0 0.0
      %1084 = vmatpush1.msra.mxu0 %v1059
      %1085 = vmatprep.subr.mxu0 0.0
      %1086 = vmatpush1.msra.mxu0 %v1060
      %1087 = vmatprep.subr.mxu0 0.0
      %1088 = vmatpush1.msra.mxu0 %v1061
      %1089 = vmatprep.subr.mxu0 0.0
      %1090 = vmatpush1.msra.mxu0 %v1062
      %1091 = vmatprep.subr.mxu0 0.0
      %1092 = vmatpush1.msra.mxu0 %v1063
      %1093 = vmatprep.subr.mxu0 0.0
      %1094 = vmatpush1.msra.mxu0 %v1064
      %1095 = vmatprep.subr.mxu0 0.0
      %1096 = vmatpush1.msra.mxu0 %v1065
      %1097 = vmatprep.subr.mxu0 0.0
      %1098 = vmatpush1.msra.mxu0 %v1066
      %1099 = vmatprep.subr.mxu0 0.0
      %1100 = vmatpush1.msra.mxu0 %v1067
      %1101 = vmatprep.subr.mxu0 0.0
      %1102 = vmatpush1.msra.mxu0 %v1068
      %1103 = vmatprep.subr.mxu0 0.0
      %1104 = vmatpush1.msra.mxu0 %v1069
      %1105 = vmatprep.subr.mxu0 0.0
      %1106 = vmatpush1.msra.mxu0 %v1070
      %1107 = vmatprep.subr.mxu0 0.0
      %1108 = vmatpush1.msra.mxu0 %v1071
      %1109 = vmatprep.subr.mxu0 0.0
      %1110 = vmatpush1.msra.mxu0 %v1072
      %1111 = vmatprep.subr.mxu0 0.0
      %1112 = vmatpush1.msra.mxu0 %v1073
      %1113 = vmatprep.subr.mxu0 0.0
      %1114 = vmatpush1.msra.mxu0 0.0
      %1115 = vmatprep.subr.mxu0 0.0
      %1116 = vmatpush1.msra.mxu0 0.0
      %1117 = vmatprep.subr.mxu0 0.0
      %1118 = vmatpush1.msra.mxu0 0.0
      %1119 = vmatprep.subr.mxu0 0.0
      %1120 = vmatpush1.msra.mxu0 0.0
      %1121 = vmatprep.subr.mxu0 0.0
      %1122 = vmatpush1.msra.mxu0 0.0
      %1123 = vmatprep.subr.mxu0 0.0
      %1124 = vmatpush1.msra.mxu0 0.0
      %1125 = vmatprep.subr.mxu0 0.0
      %1126 = vmatpush1.msra.mxu0 0.0
      %1127 = vmatprep.subr.mxu0 0.0
      %1128 = vmatpush1.msra.mxu0 0.0
      %1129 = vmatprep.subr.mxu0 0.0
      %1130 = vmatpush1.msra.mxu0 0.0
      %1131 = vmatprep.subr.mxu0 0.0
      %1132 = vmatpush1.msra.mxu0 0.0
      %1133 = vmatprep.subr.mxu0 0.0
      %1134 = vmatpush1.msra.mxu0 0.0
      %1135 = vmatprep.subr.mxu0 0.0
      %1136 = vmatpush1.msra.mxu0 0.0
      %1137 = vmatprep.subr.mxu0 0.0
      %1138 = vmatpush1.msra.mxu0 0.0
      %1139 = vmatprep.subr.mxu0 0.0
      %1140 = vmatpush1.msra.mxu0 0.0
      %1141 = vmatprep.subr.mxu0 0.0
      %1142 = vmatpush1.msra.mxu0 0.0
      %1143 = vmatprep.subr.mxu0 0.0
      %1144 = vmatpush1.msra.mxu0 0.0
      %1145 = vmatprep.mubr.f32.mxu0 0.0
      %1146 = vmatmul.mubr.f32.gmra.mrb[0].mxu0 %v1026
      %v1147 = vpop.f32.mrb[0].mxu0
      %v1148 = vadd.f32 %v1079, %v1147
      %v1149 = vpop.f32.mrb[0].mxu0
      %1150 = vmatprep.mubr.f32.mxu0 0.0
      %1151 = vmatmul.mubr.f32.gmra.mrb[0].mxu0 %v1027
      %v1152 = vpop.f32.mrb[0].mxu0
      %v1153 = vadd.f32 %v1079, %v1152
      %v1154 = vpop.f32.mrb[0].mxu0
      %1155 = vmatprep.mubr.f32.mxu0 0.0
      %1156 = vmatmul.mubr.f32.gmra.mrb[0].mxu0 %v1028
      %v1157 = vpop.f32.mrb[0].mxu0
      %v1158 = vadd.f32 %v1079, %v1157
      %v1159 = vpop.f32.mrb[0].mxu0
      %1160 = vmatprep.mubr.f32.mxu0 0.0
      %1161 = vmatmul.mubr.f32.gmra.mrb[0].mxu0 %v1029
      %v1162 = vpop.f32.mrb[0].mxu0
      %v1163 = vadd.f32 %v1079, %v1162
      %v1164 = vpop.f32.mrb[0].mxu0
      %1165 = vmatprep.mubr.f32.mxu0 0.0
      %1166 = vmatmul.mubr.f32.gmra.mrb[0].mxu0 %v1030
      %v1167 = vpop.f32.mrb[0].mxu0
      %v1168 = vadd.f32 %v1079, %v1167
      %v1169 = vpop.f32.mrb[0].mxu0
      %1170 = vmatprep.mubr.f32.mxu0 0.0
      %1171 = vmatmul.mubr.f32.gmra.mrb[0].mxu0 %v1031
      %v1172 = vpop.f32.mrb[0].mxu0
      %v1173 = vadd.f32 %v1079, %v1172
      %v1174 = vpop.f32.mrb[0].mxu0
      %1175 = vmatprep.mubr.f32.mxu0 0.0
      %1176 = vmatmul.mubr.f32.gmra.mrb[0].mxu0 %v1032
      %v1177 = vpop.f32.mrb[0].mxu0
      %v1178 = vadd.f32 %v1079, %v1177
      %v1179 = vpop.f32.mrb[0].mxu0
      %1180 = vmatprep.mubr.f32.mxu0 0.0
      %1181 = vmatmul.mubr.f32.gmra.mrb[0].mxu0 %v1033
      %v1182 = vpop.f32.mrb[0].mxu0
      %v1183 = vadd.f32 %v1079, %v1182
      %v1184 = vpop.f32.mrb[0].mxu0
      %1185 = vmatprep.mubr.f32.mxu0 0.0
      %1186 = vmatmul.mubr.f32.gmra.mrb[0].mxu0 %v1034
      %v1187 = vpop.f32.mrb[0].mxu0
      %v1188 = vadd.f32 %v1079, %v1187
      %v1189 = vpop.f32.mrb[0].mxu0
      %1190 = vmatprep.mubr.f32.mxu0 0.0
      %1191 = vmatmul.mubr.f32.gmra.mrb[0].mxu0 %v1035
      %v1192 = vpop.f32.mrb[0].mxu0
      %v1193 = vadd.f32 %v1079, %v1192
      %v1194 = vpop.f32.mrb[0].mxu0
      %1195 = vmatprep.mubr.f32.mxu0 0.0
      %1196 = vmatmul.mubr.f32.gmra.mrb[0].mxu0 %v1036
      %v1197 = vpop.f32.mrb[0].mxu0
      %v1198 = vadd.f32 %v1079, %v1197
      %v1199 = vpop.f32.mrb[0].mxu0
      %1200 = vmatprep.mubr.f32.mxu0 0.0
      %1201 = vmatmul.mubr.f32.gmra.mrb[0].mxu0 %v1037
      %v1202 = vpop.f32.mrb[0].mxu0
      %v1203 = vadd.f32 %v1079, %v1202
      %v1204 = vpop.f32.mrb[0].mxu0
      %1205 = vmatprep.mubr.f32.mxu0 0.0
      %1206 = vmatmul.mubr.f32.gmra.mrb[0].mxu0 %v1038
      %v1207 = vpop.f32.mrb[0].mxu0
      %v1208 = vadd.f32 %v1079, %v1207
      %v1209 = vpop.f32.mrb[0].mxu0
      %1210 = vmatprep.mubr.f32.mxu0 0.0
      %1211 = vmatmul.mubr.f32.gmra.mrb[0].mxu0 %v1039
      %v1212 = vpop.f32.mrb[0].mxu0
      %v1213 = vadd.f32 %v1079, %v1212
      %v1214 = vpop.f32.mrb[0].mxu0
      %1215 = vmatprep.mubr.f32.mxu0 0.0
      %1216 = vmatmul.mubr.f32.gmra.mrb[0].mxu0 %v1040
      %v1217 = vpop.f32.mrb[0].mxu0
      %v1218 = vadd.f32 %v1079, %v1217
      %v1219 = vpop.f32.mrb[0].mxu0
      %1220 = vmatprep.mubr.f32.mxu0 0.0
      %1221 = vmatmul.mubr.f32.gmra.mrb[0].mxu0 %v1041
      %v1222 = vpop.f32.mrb[0].mxu0
      %v1223 = vadd.f32 %v1079, %v1222
      %v1224 = vpop.f32.mrb[0].mxu0
      %1225 = vmatprep.mubr.f32.mxu0 0.0
      %1226 = vmatmul.mubr.f32.gmra.mrb[0].mxu0 %v1042
      %v1227 = vpop.f32.mrb[0].mxu0
      %v1228 = vadd.f32 %v1079, %v1227
      %v1229 = vpop.f32.mrb[0].mxu0
      %1230 = vmatprep.mubr.f32.mxu0 0.0
      %1231 = vmatmul.mubr.f32.gmra.mrb[0].mxu0 %v1043
      %v1232 = vpop.f32.mrb[0].mxu0
      %v1233 = vadd.f32 %v1079, %v1232
      %v1234 = vpop.f32.mrb[0].mxu0
      %1235 = vmatprep.mubr.f32.mxu0 0.0
      %1236 = vmatmul.mubr.f32.gmra.mrb[0].mxu0 %v1044
      %v1237 = vpop.f32.mrb[0].mxu0
      %v1238 = vadd.f32 %v1079, %v1237
      %v1239 = vpop.f32.mrb[0].mxu0
      %1240 = vmatprep.mubr.f32.mxu0 0.0
      %1241 = vmatmul.mubr.f32.gmra.mrb[0].mxu0 %v1045
      %v1242 = vpop.f32.mrb[0].mxu0
      %v1243 = vadd.f32 %v1079, %v1242
      %v1244 = vpop.f32.mrb[0].mxu0
      %1245 = vmatprep.mubr.f32.mxu0 0.0
      %1246 = vmatmul.mubr.f32.gmra.mrb[0].mxu0 %v1046
      %v1247 = vpop.f32.mrb[0].mxu0
      %v1248 = vadd.f32 %v1079, %v1247
      %v1249 = vpop.f32.mrb[0].mxu0
      %1250 = vmatprep.mubr.f32.mxu0 0.0
      %1251 = vmatmul.mubr.f32.gmra.mrb[0].mxu0 %v1047
      %v1252 = vpop.f32.mrb[0].mxu0
      %v1253 = vadd.f32 %v1079, %v1252
      %v1254 = vpop.f32.mrb[0].mxu0
      %1255 = vmatprep.mubr.f32.mxu0 0.0
      %1256 = vmatmul.mubr.f32.gmra.mrb[0].mxu0 %v1048
      %v1257 = vpop.f32.mrb[0].mxu0
      %v1258 = vadd.f32 %v1079, %v1257
      %v1259 = vpop.f32.mrb[0].mxu0
      %1260 = vmatprep.mubr.f32.mxu0 0.0
      %1261 = vmatmul.mubr.f32.gmra.mrb[0].mxu0 %v1049
      %v1262 = vpop.f32.mrb[0].mxu0
      %v1263 = vadd.f32 %v1079, %v1262
      %v1264 = vpop.f32.mrb[0].mxu0
      %1265 = vmatprep.mubr.f32.mxu0 0.0
      %1266 = vmatmul.mubr.f32.gmra.mrb[0].mxu0 %v1050
      %v1267 = vpop.f32.mrb[0].mxu0
      %v1268 = vadd.f32 %v1079, %v1267
      %v1269 = vpop.f32.mrb[0].mxu0
      %1270 = vmatprep.mubr.f32.mxu0 0.0
      %1271 = vmatmul.mubr.f32.gmra.mrb[0].mxu0 %v1051
      %v1272 = vpop.f32.mrb[0].mxu0
      %v1273 = vadd.f32 %v1079, %v1272
      %v1274 = vpop.f32.mrb[0].mxu0
      %1275 = vmatprep.mubr.f32.mxu0 0.0
      %1276 = vmatmul.mubr.f32.gmra.mrb[0].mxu0 %v1052
      %v1277 = vpop.f32.mrb[0].mxu0
      %v1278 = vadd.f32 %v1079, %v1277
      %v1279 = vpop.f32.mrb[0].mxu0
      %1280 = vmatprep.mubr.f32.mxu0 0.0
      %1281 = vmatmul.mubr.f32.gmra.mrb[0].mxu0 %v1053
      %v1282 = vpop.f32.mrb[0].mxu0
      %v1283 = vadd.f32 %v1079, %v1282
      %v1284 = vpop.f32.mrb[0].mxu0
      %1285 = vmatprep.mubr.f32.mxu0 0.0
      %1286 = vmatmul.mubr.f32.gmra.mrb[0].mxu0 %v1054
      %v1287 = vpop.f32.mrb[0].mxu0
      %v1288 = vadd.f32 %v1079, %v1287
      %v1289 = vpop.f32.mrb[0].mxu0
      %1290 = vmatprep.mubr.f32.mxu0 0.0
      %1291 = vmatmul.mubr.f32.gmra.mrb[0].mxu0 %v1055
      %v1292 = vpop.f32.mrb[0].mxu0
      %v1293 = vadd.f32 %v1079, %v1292
      %v1294 = vpop.f32.mrb[0].mxu0
      %1295 = vmatprep.mubr.f32.mxu0 0.0
      %1296 = vmatmul.mubr.f32.gmra.mrb[0].mxu0 %v1056
      %v1297 = vpop.f32.mrb[0].mxu0
      %v1298 = vadd.f32 %v1079, %v1297
      %v1299 = vpop.f32.mrb[0].mxu0
      %1300 = vmatprep.mubr.f32.mxu0 0.0
      %1301 = vmatmul.mubr.f32.gmra.mrb[0].mxu0 %v1057
      %v1302 = vpop.f32.mrb[0].mxu0
      %v1303 = vadd.f32 %v1079, %v1302
      %v1304 = vpop.f32.mrb[0].mxu0
      %1305 = vdwg.mxu0
      %v1306 = vtanh.pop %v1148
      %v1307 = vtanh.pop %v1153
      %v1308 = vtanh.pop %v1158
      %v1309 = vtanh.pop %v1163
      %v1310 = vtanh.pop %v1168
      %v1311 = vtanh.pop %v1173
      %v1312 = vtanh.pop %v1178
      %v1313 = vtanh.pop %v1183
      %v1314 = vtanh.pop %v1188
      %v1315 = vtanh.pop %v1193
      %v1316 = vtanh.pop %v1198
      %v1317 = vtanh.pop %v1203
      %v1318 = vtanh.pop %v1208
      %v1319 = vtanh.pop %v1213
      %v1320 = vtanh.pop %v1218
      %v1321 = vtanh.pop %v1223
      %v1322 = vtanh.pop %v1228
      %v1323 = vtanh.pop %v1233
      %v1324 = vtanh.pop %v1238
      %v1325 = vtanh.pop %v1243
      %v1326 = vtanh.pop %v1248
      %v1327 = vtanh.pop %v1253
      %v1328 = vtanh.pop %v1258
      %v1329 = vtanh.pop %v1263
      %v1330 = vtanh.pop %v1268
      %v1331 = vtanh.pop %v1273
      %v1332 = vtanh.pop %v1278
      %v1333 = vtanh.pop %v1283
      %v1334 = vtanh.pop %v1288
      %v1335 = vtanh.pop %v1293
      %v1336 = vtanh.pop %v1298
      %v1337 = vtanh.pop %v1303
      %vm1338 = vcmask 23552
      %1339 = vst.msk [vmem:[%s280] sm:$0xff] %vm1338, %v1306
      %1340 = vst.msk [vmem:[%s280 + $0x8] sm:$0xff] %vm1338, %v1307
      %1341 = vst.msk [vmem:[%s280 + $0x10] sm:$0xff] %vm1338, %v1308
      %1342 = vst.msk [vmem:[%s280 + $0x18] sm:$0xff] %vm1338, %v1309
      %1343 = vst.msk [vmem:[%s280 + $0x20] sm:$0xff] %vm1338, %v1310
      %1344 = vst.msk [vmem:[%s280 + $0x28] sm:$0xff] %vm1338, %v1311
      %1345 = vst.msk [vmem:[%s280 + $0x30] sm:$0xff] %vm1338, %v1312
      %1346 = vst.msk [vmem:[%s280 + $0x38] sm:$0xff] %vm1338, %v1313
      %1347 = vst.msk [vmem:[%s280 + $0x40] sm:$0xff] %vm1338, %v1314
      %1348 = vst.msk [vmem:[%s280 + $0x48] sm:$0xff] %vm1338, %v1315
      %1349 = vst.msk [vmem:[%s280 + $0x50] sm:$0xff] %vm1338, %v1316
      %1350 = vst.msk [vmem:[%s280 + $0x58] sm:$0xff] %vm1338, %v1317
      %1351 = vst.msk [vmem:[%s280 + $0x60] sm:$0xff] %vm1338, %v1318
      %1352 = vst.msk [vmem:[%s280 + $0x68] sm:$0xff] %vm1338, %v1319
      %1353 = vst.msk [vmem:[%s280 + $0x70] sm:$0xff] %vm1338, %v1320
      %1354 = vst.msk [vmem:[%s280 + $0x78] sm:$0xff] %vm1338, %v1321
      %1355 = vst.msk [vmem:[%s280 + $0x80] sm:$0xff] %vm1338, %v1322
      %1356 = vst.msk [vmem:[%s280 + $0x88] sm:$0xff] %vm1338, %v1323
      %1357 = vst.msk [vmem:[%s280 + $0x90] sm:$0xff] %vm1338, %v1324
      %1358 = vst.msk [vmem:[%s280 + $0x98] sm:$0xff] %vm1338, %v1325
      %1359 = vst.msk [vmem:[%s280 + $0xa0] sm:$0xff] %vm1338, %v1326
      %1360 = vst.msk [vmem:[%s280 + $0xa8] sm:$0xff] %vm1338, %v1327
      %1361 = vst.msk [vmem:[%s280 + $0xb0] sm:$0xff] %vm1338, %v1328
      %1362 = vst.msk [vmem:[%s280 + $0xb8] sm:$0xff] %vm1338, %v1329
      %1363 = vst.msk [vmem:[%s280 + $0xc0] sm:$0xff] %vm1338, %v1330
      %1364 = vst.msk [vmem:[%s280 + $0xc8] sm:$0xff] %vm1338, %v1331
      %1365 = vst.msk [vmem:[%s280 + $0xd0] sm:$0xff] %vm1338, %v1332
      %1366 = vst.msk [vmem:[%s280 + $0xd8] sm:$0xff] %vm1338, %v1333
      %1367 = vst.msk [vmem:[%s280 + $0xe0] sm:$0xff] %vm1338, %v1334
      %1368 = vst.msk [vmem:[%s280 + $0xe8] sm:$0xff] %vm1338, %v1335
      %1369 = vst.msk [vmem:[%s280 + $0xf0] sm:$0xff] %vm1338, %v1336
      %1370 = vst.msk [vmem:[%s280 + $0xf8] sm:$0xff] %vm1338, %v1337
      %s1371 = smul.u32 32, %s18
      %p1372 = scmp.lt.s32.totalorder %s1371, 127
      %s1373 = scalar_select %p1372, %s1371, 127
      %s1374 = smul.addr %s1373, 8
      %s1375 = scalar_lea.vmem %s7, %s1374
      // Predicated region
      $region49: #{patch_deformation_mlp.3} parent=47 // pred_check
        %p1376 = pneg %p188
      $region50: #{patch_deformation_mlp.3} parent=47 // pred_check_branch
        %1378 = sbr.rel (%p1376) target = $region52
      $region51: #{patch_deformation_mlp.3} parent=47 // pred_region
        %s1379 = smul.u32 32, %s18
      $region52: #{patch_deformation_mlp.3} parent=47 // pred_fallthru
        _
    $region48: #{patch_deformation_mlp.3} parent=5 // pred_fallthru
      _
    %p1380 = scmp.le.s32.totalorder 2, %s13
    // Predicated region
    $region53: #{patch_deformation_mlp.3} parent=5 // pred_check
      %p1381 = pneg %p1380
    $region54: #{patch_deformation_mlp.3} parent=5 // pred_check_branch
      %1383 = sbr.rel (%p1381) target = $region56
    $region55: #{patch_deformation_mlp.3} parent=5 // pred_region
      %s1384 = ssub.s32 %s13, 2
      // Predicated region
      $region57: #{patch_deformation_mlp.3} parent=55 // pred_check
        %p1385 = pneg %p194
      $region58: #{patch_deformation_mlp.3} parent=55 // pred_check_branch
        %1387 = sbr.rel (%p1385) target = $region60
      $region59: #{patch_deformation_mlp.3} parent=55 // pred_region
        %s1388 = smul.u32 32, %s19
        %p1389 = scmp.lt.s32.totalorder %s1388, 127
        %s1390 = scalar_select %p1389, %s1388, 127
        %s1391 = smul.addr %s1390, 8
        %s1392 = scalar_lea.vmem %s7, %s1391
      $region60: #{patch_deformation_mlp.3} parent=55 // pred_fallthru
        _
    $region56: #{patch_deformation_mlp.3} parent=5 // pred_fallthru
      _
  $region6: #{patch_deformation_mlp.3} parent=0 // loop_footer
    %s17 = sadd.s32 1, %s13
  $region7: #{patch_deformation_mlp.3} parent=0 // loop_footer_branch
    %12 = sbr.rel target = $region3
  $region8: #{patch_deformation_mlp.3} parent=0 // loop_exit
    _

// kernel: patch_deformation_mlp.2
$region0: #{patch_deformation_mlp.2}
  #allocation0 [shape = 'u32[]', space=smem, size = 0x4, offset = 0x4, fixed_abs, tag = 'smem constant byte address 0x4 - core index']
  #allocation1 [shape = 'u32[144,128]{1,0:T(1,128)}', space=vmem, size = 0x12000, scoped, tag = 'internal scratch']
  %s0 = inlined_call_operand.vmem [shape: f32[1024,2], index: 0, kind: input, shape index: {}]
  %s1 = inlined_call_operand.vmem [shape: f32[2,128], index: 1, kind: input, shape index: {}]
  %s2 = inlined_call_operand.vmem [shape: f32[1,128], index: 2, kind: input, shape index: {}]
  %s3 = inlined_call_operand.vmem [shape: f32[128,128], index: 3, kind: input, shape index: {}]
  %s4 = inlined_call_operand.vmem [shape: f32[2,1,128], index: 4, kind: output, shape index: {0}]
  %s5 = inlined_call_operand.vmem [shape: f32[2,1,128], index: 5, kind: output, shape index: {1}]
  %6 = xla_tuple %s4, %s5
  %s7 = sld [smem:[#allocation0]]
  $region69: #{patch_deformation_mlp.2} parent=0
    _
  %s9 = ssub.s32 1, %s7
  %s10 = scalar_select 0, %s9, %s7
  loop: start=0, step=1, limit=6
  $region2: #{patch_deformation_mlp.2} parent=0 // loop_pre_header
    _
  $region3: #{patch_deformation_mlp.2} parent=0 // loop_header
    %s12 = sphi 0, %s16
    %p13 = scmp.ge.s32.totalorder %s12, 6
    %s19 = sphi 0, %s31
    %s20 = sphi 0, %s27
    %s21 = sphi 0, %s19
    %s22 = sphi 0, %s20
    %s23 = sphi 0, %s21
    %s24 = sphi 0, %s22
    %s38 = sphi 0, %s40
    %s41 = sphi 0, %s38
    %s42 = sphi 0, %s41
    %s58 = sphi 0, %s42
    %s62 = sphi 0, %s62
    %s64 = sphi 0, %s62
    %s65 = sphi 0, %s64
    %s79 = sphi 0, %s65
    %s83 = sphi 0, %s83
    %s85 = sphi 0, %s83
    %s86 = sphi 0, %s85
    %s100 = sphi 0, %s86
    %s104 = sphi 0, %s104
    %s106 = sphi 0, %s104
    %s107 = sphi 0, %s106
    %s121 = sphi 0, %s107
    %s127 = sphi 0, %s129
    %s130 = sphi 0, %s127
    %s131 = sphi 0, %s130
    %s147 = sphi 0, %s131
    %s153 = sphi 0, %s155
    %s156 = sphi 0, %s153
    %s157 = sphi 0, %s156
    %s173 = sphi 0, %s157
  $region4: #{patch_deformation_mlp.2} parent=0 // loop_header_branch
    %15 = sbr.rel (%p13) target = $region8
  $region5: #{patch_deformation_mlp.2} parent=0 // loop_body
    %s17 = ssub.s32 %s12, 1
    %s18 = ssub.s32 %s12, 2
    %s25 = sadd.s32 1, %s20
    %p26 = scmp.ge.s32.totalorder %s25, 2
    %s27 = scalar_select %p26, 0, %s25
    %s28 = sadd.s32 1, %s19
    %s29 = scalar_select %p26, %s28, %s19
    %p30 = scmp.ge.s32.totalorder %s29, 2
    %s31 = scalar_select %p30, 0, %s29
    %s32 = smul.u32 %s19, 2
    %s33 = sadd.s32 %s32, %s20
    %s34 = smul.u32 %s31, 2
    %s35 = sadd.s32 %s34, %s27
    %s36 = ssub.s32 %s33, %s35
    %p37 = scmp.eq.s32.totalorder %s36, 0
    %s39 = sadd.s32 %s38, 1
    %s40 = scalar_select %p37, %s38, %s39
    %p43 = pneg %p37
    %p44 = scmp.eq.s32.totalorder %s12, 3
    %p45 = por %p43, %p44
    %p46 = scmp.ne.s32.totalorder %s38, %s41
    %p47 = scmp.eq.s32.totalorder %s12, 0
    %p48 = por %p46, %p47
    %p49 = scmp.ne.s32.totalorder %s38, %s41
    %p50 = scmp.eq.s32.totalorder %s17, 3
    %p51 = por %p49, %p50
    %p52 = scmp.ne.s32.totalorder %s41, %s42
    %p53 = scmp.eq.s32.totalorder %s17, 0
    %p54 = por %p52, %p53
    %p55 = scmp.ne.s32.totalorder %s41, %s42
    %p56 = scmp.eq.s32.totalorder %s18, 3
    %p57 = por %p55, %p56
    %p59 = scmp.ne.s32.totalorder %s42, %s58
    %p60 = scmp.eq.s32.totalorder %s18, 0
    %p61 = por %p59, %p60
    %s63 = sadd.s32 %s62, 1
    %p66 = scmp.eq.s32.totalorder %s12, 3
    %p67 = scmp.ne.s32.totalorder %s62, %s64
    %p68 = scmp.eq.s32.totalorder %s12, 0
    %p69 = por %p67, %p68
    %p70 = scmp.ne.s32.totalorder %s62, %s64
    %p71 = scmp.eq.s32.totalorder %s17, 3
    %p72 = por %p70, %p71
    %p73 = scmp.ne.s32.totalorder %s64, %s65
    %p74 = scmp.eq.s32.totalorder %s17, 0
    %p75 = por %p73, %p74
    %p76 = scmp.ne.s32.totalorder %s64, %s65
    %p77 = scmp.eq.s32.totalorder %s18, 3
    %p78 = por %p76, %p77
    %p80 = scmp.ne.s32.totalorder %s65, %s79
    %p81 = scmp.eq.s32.totalorder %s18, 0
    %p82 = por %p80, %p81
    %s84 = sadd.s32 %s83, 1
    %p87 = scmp.eq.s32.totalorder %s12, 3
    %p88 = scmp.ne.s32.totalorder %s83, %s85
    %p89 = scmp.eq.s32.totalorder %s12, 0
    %p90 = por %p88, %p89
    %p91 = scmp.ne.s32.totalorder %s83, %s85
    %p92 = scmp.eq.s32.totalorder %s17, 3
    %p93 = por %p91, %p92
    %p94 = scmp.ne.s32.totalorder %s85, %s86
    %p95 = scmp.eq.s32.totalorder %s17, 0
    %p96 = por %p94, %p95
    %p97 = scmp.ne.s32.totalorder %s85, %s86
    %p98 = scmp.eq.s32.totalorder %s18, 3
    %p99 = por %p97, %p98
    %p101 = scmp.ne.s32.totalorder %s86, %s100
    %p102 = scmp.eq.s32.totalorder %s18, 0
    %p103 = por %p101, %p102
    %s105 = sadd.s32 %s104, 1
    %p108 = scmp.eq.s32.totalorder %s12, 3
    %p109 = scmp.ne.s32.totalorder %s104, %s106
    %p110 = scmp.eq.s32.totalorder %s12, 0
    %p111 = por %p109, %p110
    %p112 = scmp.ne.s32.totalorder %s104, %s106
    %p113 = scmp.eq.s32.totalorder %s17, 3
    %p114 = por %p112, %p113
    %p115 = scmp.ne.s32.totalorder %s106, %s107
    %p116 = scmp.eq.s32.totalorder %s17, 0
    %p117 = por %p115, %p116
    %p118 = scmp.ne.s32.totalorder %s106, %s107
    %p119 = scmp.eq.s32.totalorder %s18, 3
    %p120 = por %p118, %p119
    %p122 = scmp.ne.s32.totalorder %s107, %s121
    %p123 = scmp.eq.s32.totalorder %s18, 0
    %p124 = por %p122, %p123
    %s125 = ssub.s32 %s19, %s31
    %p126 = scmp.eq.s32.totalorder %s125, 0
    %s128 = sadd.s32 %s127, 1
    %s129 = scalar_select %p126, %s127, %s128
    %p132 = pneg %p126
    %p133 = scmp.eq.s32.totalorder %s12, 3
    %p134 = por %p132, %p133
    %p135 = scmp.ne.s32.totalorder %s127, %s130
    %p136 = scmp.eq.s32.totalorder %s12, 0
    %p137 = por %p135, %p136
    %p138 = scmp.ne.s32.totalorder %s127, %s130
    %p139 = scmp.eq.s32.totalorder %s17, 3
    %p140 = por %p138, %p139
    %p141 = scmp.ne.s32.totalorder %s130, %s131
    %p142 = scmp.eq.s32.totalorder %s17, 0
    %p143 = por %p141, %p142
    %p144 = scmp.ne.s32.totalorder %s130, %s131
    %p145 = scmp.eq.s32.totalorder %s18, 3
    %p146 = por %p144, %p145
    %p148 = scmp.ne.s32.totalorder %s131, %s147
    %p149 = scmp.eq.s32.totalorder %s18, 0
    %p150 = por %p148, %p149
    %s151 = ssub.s32 %s19, %s31
    %p152 = scmp.eq.s32.totalorder %s151, 0
    %s154 = sadd.s32 %s153, 1
    %s155 = scalar_select %p152, %s153, %s154
    %p158 = pneg %p152
    %p159 = scmp.eq.s32.totalorder %s12, 3
    %p160 = por %p158, %p159
    %p161 = scmp.ne.s32.totalorder %s153, %s156
    %p162 = scmp.eq.s32.totalorder %s12, 0
    %p163 = por %p161, %p162
    %p164 = scmp.ne.s32.totalorder %s153, %s156
    %p165 = scmp.eq.s32.totalorder %s17, 3
    %p166 = por %p164, %p165
    %p167 = scmp.ne.s32.totalorder %s156, %s157
    %p168 = scmp.eq.s32.totalorder %s17, 0
    %p169 = por %p167, %p168
    %p170 = scmp.ne.s32.totalorder %s156, %s157
    %p171 = scmp.eq.s32.totalorder %s18, 3
    %p172 = por %p170, %p171
    %p174 = scmp.ne.s32.totalorder %s157, %s173
    %p175 = scmp.eq.s32.totalorder %s18, 0
    %p176 = por %p174, %p175
    %p177 = scmp.le.s32.totalorder 1, %s12
    %p178 = scmp.lt.s32.totalorder %s12, 5
    %p179 = pnand %p177, %p178
    %p180 = pneg %p179
    // Predicated region
    $region9: #{patch_deformation_mlp.2} parent=5 // pred_check
      _
    $region10: #{patch_deformation_mlp.2} parent=5 // pred_check_branch
      %182 = sbr.rel (%p179) target = $region12
    $region11: #{patch_deformation_mlp.2} parent=5 // pred_region
      %s183 = ssub.s32 %s12, 1
      // Predicated region
      $region13: #{patch_deformation_mlp.2} parent=11 // pred_check
        %p184 = pneg %p75
      $region14: #{patch_deformation_mlp.2} parent=11 // pred_check_branch
        %186 = sbr.rel (%p184) target = $region16
      $region15: #{patch_deformation_mlp.2} parent=11 // pred_region
        _
      $region16: #{patch_deformation_mlp.2} parent=11 // pred_fallthru
        _
      // Predicated region
      $region17: #{patch_deformation_mlp.2} parent=11 // pred_check
        %p187 = pneg %p96
      $region18: #{patch_deformation_mlp.2} parent=11 // pred_check_branch
        %189 = sbr.rel (%p187) target = $region20
      $region19: #{patch_deformation_mlp.2} parent=11 // pred_region
        _
      $region20: #{patch_deformation_mlp.2} parent=11 // pred_fallthru
        _
      // Predicated region
      $region21: #{patch_deformation_mlp.2} parent=11 // pred_check
        %p190 = pneg %p117
      $region22: #{patch_deformation_mlp.2} parent=11 // pred_check_branch
        %192 = sbr.rel (%p190) target = $region24
      $region23: #{patch_deformation_mlp.2} parent=11 // pred_region
        _
      $region24: #{patch_deformation_mlp.2} parent=11 // pred_fallthru
        _
    $region12: #{patch_deformation_mlp.2} parent=5 // pred_fallthru
      _
    %p193 = scmp.lt.s32.totalorder %s12, 4
    // Predicated region
    $region25: #{patch_deformation_mlp.2} parent=5 // pred_check
      %p194 = pneg %p193
    $region26: #{patch_deformation_mlp.2} parent=5 // pred_check_branch
      %196 = sbr.rel (%p194) target = $region28
    $region27: #{patch_deformation_mlp.2} parent=5 // pred_region
      // Predicated region
      $region29: #{patch_deformation_mlp.2} parent=27 // pred_check
        %p197 = pneg %p48
      $region30: #{patch_deformation_mlp.2} parent=27 // pred_check_branch
        %199 = sbr.rel (%p197) target = $region32
      $region31: #{patch_deformation_mlp.2} parent=27 // pred_region
        %s200 = smul.u32 %s19, 2
        %s201 = sadd.s32 %s200, %s20
        %s202 = smul.u32 32, %s201
        %p203 = scmp.lt.s32.totalorder %s202, 127
        %s204 = scalar_select %p203, %s202, 127
        %s205 = smul.addr %s204, 8
        %s206 = scalar_lea.vmem %s0, %s205
        %s207 = smul.u32 %s19, 2
        %s208 = sadd.s32 %s207, %s20
        %s209 = smul.u32 32, %s208
      $region32: #{patch_deformation_mlp.2} parent=27 // pred_fallthru
        _
    $region28: #{patch_deformation_mlp.2} parent=5 // pred_fallthru
      _
    %p210 = scmp.le.s32.totalorder 1, %s12
    %p211 = scmp.lt.s32.totalorder %s12, 5
    %p212 = pnand %p210, %p211
    %p213 = pneg %p212
    // Predicated region
    $region33: #{patch_deformation_mlp.2} parent=5 // pred_check
      _
    $region34: #{patch_deformation_mlp.2} parent=5 // pred_check_branch
      %215 = sbr.rel (%p212) target = $region36
    $region35: #{patch_deformation_mlp.2} parent=5 // pred_region
      %s216 = ssub.s32 %s12, 1
      %s217 = smul.u32 %s21, 2
      %s218 = sadd.s32 %s217, %s22
      %s219 = smul.u32 32, %s218
      %p220 = scmp.lt.s32.totalorder %s219, 127
      %s221 = scalar_select %p220, %s219, 127
      %s222 = smul.addr %s221, 8
      %s223 = scalar_lea.vmem %s0, %s222
      %p224 = pneg %p54
      %p225 = pneg %p51
      %p226 = pneg %p75
      %p227 = pneg %p72
      %p228 = pneg %p96
      %p229 = pneg %p93
      %p230 = pneg %p117
      %p231 = pneg %p114
      %p232 = pneg %p143
      %p233 = pneg %p140
      %p234 = scmp.lt.s32.totalorder %s21, 1
      %s235 = scalar_select %p234, %s21, 1
      %s236 = scalar_lea.vmem %s4, %s235
      %p237 = pneg %p169
      %p238 = pneg %p166
      %p239 = scmp.lt.s32.totalorder %s21, 1
      %s240 = scalar_select %p239, %s21, 1
      %s241 = scalar_lea.vmem %s5, %s240
      %s242 = smul.u32 %s21, 2
      %s243 = sadd.s32 %s242, %s22
      %s244 = smul.u32 32, %s243
      %p245 = scmp.lt.s32.totalorder %s244, 127
      %s246 = scalar_select %p245, %s244, 127
      %s247 = smul.addr %s246, 8
      %s248 = scalar_lea.vmem %s0, %s247
      %s249 = smul.u32 %s21, 2
      %s250 = sadd.s32 %s249, %s22
      %s251 = smul.u32 32, %s250
      %p252 = scmp.lt.s32.totalorder %s21, 1
      %s253 = scalar_select %p252, %s21, 1
      %s254 = scalar_lea.vmem %s4, %s253
      %p255 = scmp.lt.s32.totalorder %s21, 1
      %s256 = scalar_select %p255, %s21, 1
      %s257 = scalar_lea.vmem %s5, %s256
      %p258 = scmp.eq.s32.totalorder %s22, 0
      // Predicated region
      $region37: #{patch_deformation_mlp.2} parent=35 // pred_check
        %p259 = pneg %p258
      $region38: #{patch_deformation_mlp.2} parent=35 // pred_check_branch
        %261 = sbr.rel (%p259) target = $region40
      $region39: #{patch_deformation_mlp.2} parent=35 // pred_region
        %262 = vst [vmem:[%s254] sm:$0x1] 0.0
        %263 = vst [vmem:[%s257] sm:$0x1] 0.0
      $region40: #{patch_deformation_mlp.2} parent=35 // pred_fallthru
        _
      %v264 = vld [vmem:[%s248] sm:$0xff]
      %v265 = vld [vmem:[%s248 + $0x8] sm:$0xff]
      %v266 = vld [vmem:[%s248 + $0x10] sm:$0xff]
      %v267 = vld [vmem:[%s248 + $0x18] sm:$0xff]
      %v268 = vld [vmem:[%s248 + $0x20] sm:$0xff]
      %v269 = vld [vmem:[%s248 + $0x28] sm:$0xff]
      %v270 = vld [vmem:[%s248 + $0x30] sm:$0xff]
      %v271 = vld [vmem:[%s248 + $0x38] sm:$0xff]
      %v272 = vld [vmem:[%s248 + $0x40] sm:$0xff]
      %v273 = vld [vmem:[%s248 + $0x48] sm:$0xff]
      %v274 = vld [vmem:[%s248 + $0x50] sm:$0xff]
      %v275 = vld [vmem:[%s248 + $0x58] sm:$0xff]
      %v276 = vld [vmem:[%s248 + $0x60] sm:$0xff]
      %v277 = vld [vmem:[%s248 + $0x68] sm:$0xff]
      %v278 = vld [vmem:[%s248 + $0x70] sm:$0xff]
      %v279 = vld [vmem:[%s248 + $0x78] sm:$0xff]
      %v280 = vld [vmem:[%s248 + $0x80] sm:$0xff]
      %v281 = vld [vmem:[%s248 + $0x88] sm:$0xff]
      %v282 = vld [vmem:[%s248 + $0x90] sm:$0xff]
      %v283 = vld [vmem:[%s248 + $0x98] sm:$0xff]
      %v284 = vld [vmem:[%s248 + $0xa0] sm:$0xff]
      %v285 = vld [vmem:[%s248 + $0xa8] sm:$0xff]
      %v286 = vld [vmem:[%s248 + $0xb0] sm:$0xff]
      %v287 = vld [vmem:[%s248 + $0xb8] sm:$0xff]
      %v288 = vld [vmem:[%s248 + $0xc0] sm:$0xff]
      %v289 = vld [vmem:[%s248 + $0xc8] sm:$0xff]
      %v290 = vld [vmem:[%s248 + $0xd0] sm:$0xff]
      %v291 = vld [vmem:[%s248 + $0xd8] sm:$0xff]
      %v292 = vld [vmem:[%s248 + $0xe0] sm:$0xff]
      %v293 = vld [vmem:[%s248 + $0xe8] sm:$0xff]
      %v294 = vld [vmem:[%s248 + $0xf0] sm:$0xff]
      %v295 = vld [vmem:[%s248 + $0xf8] sm:$0xff]
      %v296 = vld [vmem:[%s1] sm:$0x3]
      %298 = vset.pattern.permute.xlu0 0
      %299 = vperm.xlu0 %298, %v264
      %v300 = vpop.permute.xlu0 %299
      %303 = vset.pattern.permute.xlu0 0
      %304 = vperm.xlu0 %303, %v265
      %v305 = vpop.permute.xlu0 %304
      %308 = vset.pattern.permute.xlu0 0
      %309 = vperm.xlu0 %308, %v266
      %v310 = vpop.permute.xlu0 %309
      %313 = vset.pattern.permute.xlu0 0
      %314 = vperm.xlu0 %313, %v267
      %v315 = vpop.permute.xlu0 %314
      %318 = vset.pattern.permute.xlu0 0
      %319 = vperm.xlu0 %318, %v268
      %v320 = vpop.permute.xlu0 %319
      %323 = vset.pattern.permute.xlu0 0
      %324 = vperm.xlu0 %323, %v269
      %v325 = vpop.permute.xlu0 %324
      %328 = vset.pattern.permute.xlu0 0
      %329 = vperm.xlu0 %328, %v270
      %v330 = vpop.permute.xlu0 %329
      %333 = vset.pattern.permute.xlu0 0
      %334 = vperm.xlu0 %333, %v271
      %v335 = vpop.permute.xlu0 %334
      %338 = vset.pattern.permute.xlu0 0
      %339 = vperm.xlu0 %338, %v272
      %v340 = vpop.permute.xlu0 %339
      %343 = vset.pattern.permute.xlu0 0
      %344 = vperm.xlu0 %343, %v273
      %v345 = vpop.permute.xlu0 %344
      %348 = vset.pattern.permute.xlu0 0
      %349 = vperm.xlu0 %348, %v274
      %v350 = vpop.permute.xlu0 %349
      %353 = vset.pattern.permute.xlu0 0
      %354 = vperm.xlu0 %353, %v275
      %v355 = vpop.permute.xlu0 %354
      %358 = vset.pattern.permute.xlu0 0
      %359 = vperm.xlu0 %358, %v276
      %v360 = vpop.permute.xlu0 %359
      %363 = vset.pattern.permute.xlu0 0
      %364 = vperm.xlu0 %363, %v277
      %v365 = vpop.permute.xlu0 %364
      %368 = vset.pattern.permute.xlu0 0
      %369 = vperm.xlu0 %368, %v278
      %v370 = vpop.permute.xlu0 %369
      %373 = vset.pattern.permute.xlu0 0
      %374 = vperm.xlu0 %373, %v279
      %v375 = vpop.permute.xlu0 %374
      %378 = vset.pattern.permute.xlu0 0
      %379 = vperm.xlu0 %378, %v280
      %v380 = vpop.permute.xlu0 %379
      %383 = vset.pattern.permute.xlu0 0
      %384 = vperm.xlu0 %383, %v281
      %v385 = vpop.permute.xlu0 %384
      %388 = vset.pattern.permute.xlu0 0
      %389 = vperm.xlu0 %388, %v282
      %v390 = vpop.permute.xlu0 %389
      %393 = vset.pattern.permute.xlu0 0
      %394 = vperm.xlu0 %393, %v283
      %v395 = vpop.permute.xlu0 %394
      %398 = vset.pattern.permute.xlu0 0
      %399 = vperm.xlu0 %398, %v284
      %v400 = vpop.permute.xlu0 %399
      %403 = vset.pattern.permute.xlu0 0
      %404 = vperm.xlu0 %403, %v285
      %v405 = vpop.permute.xlu0 %404
      %408 = vset.pattern.permute.xlu0 0
      %409 = vperm.xlu0 %408, %v286
      %v410 = vpop.permute.xlu0 %409
      %413 = vset.pattern.permute.xlu0 0
      %414 = vperm.xlu0 %413, %v287
      %v415 = vpop.permute.xlu0 %414
      %418 = vset.pattern.permute.xlu0 0
      %419 = vperm.xlu0 %418, %v288
      %v420 = vpop.permute.xlu0 %419
      %423 = vset.pattern.permute.xlu0 0
      %424 = vperm.xlu0 %423, %v289
      %v425 = vpop.permute.xlu0 %424
      %428 = vset.pattern.permute.xlu0 0
      %429 = vperm.xlu0 %428, %v290
      %v430 = vpop.permute.xlu0 %429
      %433 = vset.pattern.permute.xlu0 0
      %434 = vperm.xlu0 %433, %v291
      %v435 = vpop.permute.xlu0 %434
      %438 = vset.pattern.permute.xlu0 0
      %439 = vperm.xlu0 %438, %v292
      %v440 = vpop.permute.xlu0 %439
      %443 = vset.pattern.permute.xlu0 0
      %444 = vperm.xlu0 %443, %v293
      %v445 = vpop.permute.xlu0 %444
      %448 = vset.pattern.permute.xlu0 0
      %449 = vperm.xlu0 %448, %v294
      %v450 = vpop.permute.xlu0 %449
      %453 = vset.pattern.permute.xlu0 0
      %454 = vperm.xlu0 %453, %v295
      %v455 = vpop.permute.xlu0 %454
      %v457 = vlaneseq
      %v458 = vshrl.u32 %v457, 7
      %v459 = vsub.s32 0, %v458
      %v460 = vrot.slane %v296, %v459
      %v461 = vmul.f32 %v300, %v460
      %v462 = vmul.f32 %v305, %v460
      %v463 = vmul.f32 %v310, %v460
      %v464 = vmul.f32 %v315, %v460
      %v465 = vmul.f32 %v320, %v460
      %v466 = vmul.f32 %v325, %v460
      %v467 = vmul.f32 %v330, %v460
      %v468 = vmul.f32 %v335, %v460
      %v469 = vmul.f32 %v340, %v460
      %v470 = vmul.f32 %v345, %v460
      %v471 = vmul.f32 %v350, %v460
      %v472 = vmul.f32 %v355, %v460
      %v473 = vmul.f32 %v360, %v460
      %v474 = vmul.f32 %v365, %v460
      %v475 = vmul.f32 %v370, %v460
      %v476 = vmul.f32 %v375, %v460
      %v477 = vmul.f32 %v380, %v460
      %v478 = vmul.f32 %v385, %v460
      %v479 = vmul.f32 %v390, %v460
      %v480 = vmul.f32 %v395, %v460
      %v481 = vmul.f32 %v400, %v460
      %v482 = vmul.f32 %v405, %v460
      %v483 = vmul.f32 %v410, %v460
      %v484 = vmul.f32 %v415, %v460
      %v485 = vmul.f32 %v420, %v460
      %v486 = vmul.f32 %v425, %v460
      %v487 = vmul.f32 %v430, %v460
      %v488 = vmul.f32 %v435, %v460
      %v489 = vmul.f32 %v440, %v460
      %v490 = vmul.f32 %v445, %v460
      %v491 = vmul.f32 %v450, %v460
      %v492 = vmul.f32 %v455, %v460
      %493 = vset.pattern.permute.xlu0 1
      %494 = vperm.xlu0 %493, %v264
      %v495 = vpop.permute.xlu0 %494
      %497 = vset.pattern.permute.xlu0 1
      %498 = vperm.xlu0 %497, %v265
      %v499 = vpop.permute.xlu0 %498
      %501 = vset.pattern.permute.xlu0 1
      %502 = vperm.xlu0 %501, %v266
      %v503 = vpop.permute.xlu0 %502
      %505 = vset.pattern.permute.xlu0 1
      %506 = vperm.xlu0 %505, %v267
      %v507 = vpop.permute.xlu0 %506
      %509 = vset.pattern.permute.xlu0 1
      %510 = vperm.xlu0 %509, %v268
      %v511 = vpop.permute.xlu0 %510
      %513 = vset.pattern.permute.xlu0 1
      %514 = vperm.xlu0 %513, %v269
      %v515 = vpop.permute.xlu0 %514
      %517 = vset.pattern.permute.xlu0 1
      %518 = vperm.xlu0 %517, %v270
      %v519 = vpop.permute.xlu0 %518
      %521 = vset.pattern.permute.xlu0 1
      %522 = vperm.xlu0 %521, %v271
      %v523 = vpop.permute.xlu0 %522
      %525 = vset.pattern.permute.xlu0 1
      %526 = vperm.xlu0 %525, %v272
      %v527 = vpop.permute.xlu0 %526
      %529 = vset.pattern.permute.xlu0 1
      %530 = vperm.xlu0 %529, %v273
      %v531 = vpop.permute.xlu0 %530
      %533 = vset.pattern.permute.xlu0 1
      %534 = vperm.xlu0 %533, %v274
      %v535 = vpop.permute.xlu0 %534
      %537 = vset.pattern.permute.xlu0 1
      %538 = vperm.xlu0 %537, %v275
      %v539 = vpop.permute.xlu0 %538
      %541 = vset.pattern.permute.xlu0 1
      %542 = vperm.xlu0 %541, %v276
      %v543 = vpop.permute.xlu0 %542
      %545 = vset.pattern.permute.xlu0 1
      %546 = vperm.xlu0 %545, %v277
      %v547 = vpop.permute.xlu0 %546
      %549 = vset.pattern.permute.xlu0 1
      %550 = vperm.xlu0 %549, %v278
      %v551 = vpop.permute.xlu0 %550
      %553 = vset.pattern.permute.xlu0 1
      %554 = vperm.xlu0 %553, %v279
      %v555 = vpop.permute.xlu0 %554
      %557 = vset.pattern.permute.xlu0 1
      %558 = vperm.xlu0 %557, %v280
      %v559 = vpop.permute.xlu0 %558
      %561 = vset.pattern.permute.xlu0 1
      %562 = vperm.xlu0 %561, %v281
      %v563 = vpop.permute.xlu0 %562
      %565 = vset.pattern.permute.xlu0 1
      %566 = vperm.xlu0 %565, %v282
      %v567 = vpop.permute.xlu0 %566
      %569 = vset.pattern.permute.xlu0 1
      %570 = vperm.xlu0 %569, %v283
      %v571 = vpop.permute.xlu0 %570
      %573 = vset.pattern.permute.xlu0 1
      %574 = vperm.xlu0 %573, %v284
      %v575 = vpop.permute.xlu0 %574
      %577 = vset.pattern.permute.xlu0 1
      %578 = vperm.xlu0 %577, %v285
      %v579 = vpop.permute.xlu0 %578
      %581 = vset.pattern.permute.xlu0 1
      %582 = vperm.xlu0 %581, %v286
      %v583 = vpop.permute.xlu0 %582
      %585 = vset.pattern.permute.xlu0 1
      %586 = vperm.xlu0 %585, %v287
      %v587 = vpop.permute.xlu0 %586
      %589 = vset.pattern.permute.xlu0 1
      %590 = vperm.xlu0 %589, %v288
      %v591 = vpop.permute.xlu0 %590
      %593 = vset.pattern.permute.xlu0 1
      %594 = vperm.xlu0 %593, %v289
      %v595 = vpop.permute.xlu0 %594
      %597 = vset.pattern.permute.xlu0 1
      %598 = vperm.xlu0 %597, %v290
      %v599 = vpop.permute.xlu0 %598
      %601 = vset.pattern.permute.xlu0 1
      %602 = vperm.xlu0 %601, %v291
      %v603 = vpop.permute.xlu0 %602
      %605 = vset.pattern.permute.xlu0 1
      %606 = vperm.xlu0 %605, %v292
      %v607 = vpop.permute.xlu0 %606
      %609 = vset.pattern.permute.xlu0 1
      %610 = vperm.xlu0 %609, %v293
      %v611 = vpop.permute.xlu0 %610
      %613 = vset.pattern.permute.xlu0 1
      %614 = vperm.xlu0 %613, %v294
      %v615 = vpop.permute.xlu0 %614
      %617 = vset.pattern.permute.xlu0 1
      %618 = vperm.xlu0 %617, %v295
      %v619 = vpop.permute.xlu0 %618
      %v621 = vlaneseq
      %v622 = vshrl.u32 %v621, 7
      %v623 = vsub.s32 1, %v622
      %v624 = vrot.slane %v296, %v623
      %v625 = vmul.f32 %v495, %v624
      %v626 = vmul.f32 %v499, %v624
      %v627 = vmul.f32 %v503, %v624
      %v628 = vmul.f32 %v507, %v624
      %v629 = vmul.f32 %v511, %v624
      %v630 = vmul.f32 %v515, %v624
      %v631 = vmul.f32 %v519, %v624
      %v632 = vmul.f32 %v523, %v624
      %v633 = vmul.f32 %v527, %v624
      %v634 = vmul.f32 %v531, %v624
      %v635 = vmul.f32 %v535, %v624
      %v636 = vmul.f32 %v539, %v624
      %v637 = vmul.f32 %v543, %v624
      %v638 = vmul.f32 %v547, %v624
      %v639 = vmul.f32 %v551, %v624
      %v640 = vmul.f32 %v555, %v624
      %v641 = vmul.f32 %v559, %v624
      %v642 = vmul.f32 %v563, %v624
      %v643 = vmul.f32 %v567, %v624
      %v644 = vmul.f32 %v571, %v624
      %v645 = vmul.f32 %v575, %v624
      %v646 = vmul.f32 %v579, %v624
      %v647 = vmul.f32 %v583, %v624
      %v648 = vmul.f32 %v587, %v624
      %v649 = vmul.f32 %v591, %v624
      %v650 = vmul.f32 %v595, %v624
      %v651 = vmul.f32 %v599, %v624
      %v652 = vmul.f32 %v603, %v624
      %v653 = vmul.f32 %v607, %v624
      %v654 = vmul.f32 %v611, %v624
      %v655 = vmul.f32 %v615, %v624
      %v656 = vmul.f32 %v619, %v624
      %v657 = vadd.f32 %v461, %v625
      %v658 = vadd.f32 %v462, %v626
      %v659 = vadd.f32 %v463, %v627
      %v660 = vadd.f32 %v464, %v628
      %v661 = vadd.f32 %v465, %v629
      %v662 = vadd.f32 %v466, %v630
      %v663 = vadd.f32 %v467, %v631
      %v664 = vadd.f32 %v468, %v632
      %v665 = vadd.f32 %v469, %v633
      %v666 = vadd.f32 %v470, %v634
      %v667 = vadd.f32 %v471, %v635
      %v668 = vadd.f32 %v472, %v636
      %v669 = vadd.f32 %v473, %v637
      %v670 = vadd.f32 %v474, %v638
      %v671 = vadd.f32 %v475, %v639
      %v672 = vadd.f32 %v476, %v640
      %v673 = vadd.f32 %v477, %v641
      %v674 = vadd.f32 %v478, %v642
      %v675 = vadd.f32 %v479, %v643
      %v676 = vadd.f32 %v480, %v644
      %v677 = vadd.f32 %v481, %v645
      %v678 = vadd.f32 %v482, %v646
      %v679 = vadd.f32 %v483, %v647
      %v680 = vadd.f32 %v484, %v648
      %v681 = vadd.f32 %v485, %v649
      %v682 = vadd.f32 %v486, %v650
      %v683 = vadd.f32 %v487, %v651
      %v684 = vadd.f32 %v488, %v652
      %v685 = vadd.f32 %v489, %v653
      %v686 = vadd.f32 %v490, %v654
      %v687 = vadd.f32 %v491, %v655
      %v688 = vadd.f32 %v492, %v656
      %v689 = vld [vmem:[%s2] sm:$0x1]
      %v691 = vlaneseq
      %v692 = vshrl.u32 %v691, 7
      %v693 = vsub.s32 0, %v692
      %v694 = vrot.slane %v689, %v693
      %v696 = vadd.f32 %v657, %v694
      %v697 = vadd.f32 %v658, %v694
      %v698 = vadd.f32 %v659, %v694
      %v699 = vadd.f32 %v660, %v694
      %v700 = vadd.f32 %v661, %v694
      %v701 = vadd.f32 %v662, %v694
      %v702 = vadd.f32 %v663, %v694
      %v703 = vadd.f32 %v664, %v694
      %v704 = vadd.f32 %v665, %v694
      %v705 = vadd.f32 %v666, %v694
      %v706 = vadd.f32 %v667, %v694
      %v707 = vadd.f32 %v668, %v694
      %v708 = vadd.f32 %v669, %v694
      %v709 = vadd.f32 %v670, %v694
      %v710 = vadd.f32 %v671, %v694
      %v711 = vadd.f32 %v672, %v694
      %v712 = vadd.f32 %v673, %v694
      %v713 = vadd.f32 %v674, %v694
      %v714 = vadd.f32 %v675, %v694
      %v715 = vadd.f32 %v676, %v694
      %v716 = vadd.f32 %v677, %v694
      %v717 = vadd.f32 %v678, %v694
      %v718 = vadd.f32 %v679, %v694
      %v719 = vadd.f32 %v680, %v694
      %v720 = vadd.f32 %v681, %v694
      %v721 = vadd.f32 %v682, %v694
      %v722 = vadd.f32 %v683, %v694
      %v723 = vadd.f32 %v684, %v694
      %v724 = vadd.f32 %v685, %v694
      %v725 = vadd.f32 %v686, %v694
      %v726 = vadd.f32 %v687, %v694
      %v727 = vadd.f32 %v688, %v694
      %v728 = vmax.f32 %v696, 0.0
      %v729 = vmax.f32 %v697, 0.0
      %v730 = vmax.f32 %v698, 0.0
      %v731 = vmax.f32 %v699, 0.0
      %v732 = vmax.f32 %v700, 0.0
      %v733 = vmax.f32 %v701, 0.0
      %v734 = vmax.f32 %v702, 0.0
      %v735 = vmax.f32 %v703, 0.0
      %v736 = vmax.f32 %v704, 0.0
      %v737 = vmax.f32 %v705, 0.0
      %v738 = vmax.f32 %v706, 0.0
      %v739 = vmax.f32 %v707, 0.0
      %v740 = vmax.f32 %v708, 0.0
      %v741 = vmax.f32 %v709, 0.0
      %v742 = vmax.f32 %v710, 0.0
      %v743 = vmax.f32 %v711, 0.0
      %v744 = vmax.f32 %v712, 0.0
      %v745 = vmax.f32 %v713, 0.0
      %v746 = vmax.f32 %v714, 0.0
      %v747 = vmax.f32 %v715, 0.0
      %v748 = vmax.f32 %v716, 0.0
      %v749 = vmax.f32 %v717, 0.0
      %v750 = vmax.f32 %v718, 0.0
      %v751 = vmax.f32 %v719, 0.0
      %v752 = vmax.f32 %v720, 0.0
      %v753 = vmax.f32 %v721, 0.0
      %v754 = vmax.f32 %v722, 0.0
      %v755 = vmax.f32 %v723, 0.0
      %v756 = vmax.f32 %v724, 0.0
      %v757 = vmax.f32 %v725, 0.0
      %v758 = vmax.f32 %v726, 0.0
      %v759 = vmax.f32 %v727, 0.0
      %v760 = vld [vmem:[%s3] sm:$0xff]
      %v761 = vld [vmem:[%s3 + $0x8] sm:$0xff]
      %v762 = vld [vmem:[%s3 + $0x10] sm:$0xff]
      %v763 = vld [vmem:[%s3 + $0x18] sm:$0xff]
      %v764 = vld [vmem:[%s3 + $0x20] sm:$0xff]
      %v765 = vld [vmem:[%s3 + $0x28] sm:$0xff]
      %v766 = vld [vmem:[%s3 + $0x30] sm:$0xff]
      %v767 = vld [vmem:[%s3 + $0x38] sm:$0xff]
      %v768 = vld [vmem:[%s3 + $0x40] sm:$0xff]
      %v769 = vld [vmem:[%s3 + $0x48] sm:$0xff]
      %v770 = vld [vmem:[%s3 + $0x50] sm:$0xff]
      %v771 = vld [vmem:[%s3 + $0x58] sm:$0xff]
      %v772 = vld [vmem:[%s3 + $0x60] sm:$0xff]
      %v773 = vld [vmem:[%s3 + $0x68] sm:$0xff]
      %v774 = vld [vmem:[%s3 + $0x70] sm:$0xff]
      %v775 = vld [vmem:[%s3 + $0x78] sm:$0xff]
      %776 = vmatprep.subr.mxu0 0.0
      %777 = vmatpush1.msra.mxu0 %v760
      %778 = vmatprep.subr.mxu0 0.0
      %779 = vmatpush1.msra.mxu0 %v761
      %780 = vmatprep.subr.mxu0 0.0
      %781 = vmatpush1.msra.mxu0 %v762
      %782 = vmatprep.subr.mxu0 0.0
      %783 = vmatpush1.msra.mxu0 %v763
      %784 = vmatprep.subr.mxu0 0.0
      %785 = vmatpush1.msra.mxu0 %v764
      %786 = vmatprep.subr.mxu0 0.0
      %787 = vmatpush1.msra.mxu0 %v765
      %788 = vmatprep.subr.mxu0 0.0
      %789 = vmatpush1.msra.mxu0 %v766
      %790 = vmatprep.subr.mxu0 0.0
      %791 = vmatpush1.msra.mxu0 %v767
      %792 = vmatprep.subr.mxu0 0.0
      %793 = vmatpush1.msra.mxu0 %v768
      %794 = vmatprep.subr.mxu0 0.0
      %795 = vmatpush1.msra.mxu0 %v769
      %796 = vmatprep.subr.mxu0 0.0
      %797 = vmatpush1.msra.mxu0 %v770
      %798 = vmatprep.subr.mxu0 0.0
      %799 = vmatpush1.msra.mxu0 %v771
      %800 = vmatprep.subr.mxu0 0.0
      %801 = vmatpush1.msra.mxu0 %v772
      %802 = vmatprep.subr.mxu0 0.0
      %803 = vmatpush1.msra.mxu0 %v773
      %804 = vmatprep.subr.mxu0 0.0
      %805 = vmatpush1.msra.mxu0 %v774
      %806 = vmatprep.subr.mxu0 0.0
      %807 = vmatpush1.msra.mxu0 %v775
      %808 = vmatprep.subr.mxu0 0.0
      %809 = vmatpush1.msra.mxu0 0.0
      %810 = vmatprep.subr.mxu0 0.0
      %811 = vmatpush1.msra.mxu0 0.0
      %812 = vmatprep.subr.mxu0 0.0
      %813 = vmatpush1.msra.mxu0 0.0
      %814 = vmatprep.subr.mxu0 0.0
      %815 = vmatpush1.msra.mxu0 0.0
      %816 = vmatprep.subr.mxu0 0.0
      %817 = vmatpush1.msra.mxu0 0.0
      %818 = vmatprep.subr.mxu0 0.0
      %819 = vmatpush1.msra.mxu0 0.0
      %820 = vmatprep.subr.mxu0 0.0
      %821 = vmatpush1.msra.mxu0 0.0
      %822 = vmatprep.subr.mxu0 0.0
      %823 = vmatpush1.msra.mxu0 0.0
      %824 = vmatprep.subr.mxu0 0.0
      %825 = vmatpush1.msra.mxu0 0.0
      %826 = vmatprep.subr.mxu0 0.0
      %827 = vmatpush1.msra.mxu0 0.0
      %828 = vmatprep.subr.mxu0 0.0
      %829 = vmatpush1.msra.mxu0 0.0
      %830 = vmatprep.subr.mxu0 0.0
      %831 = vmatpush1.msra.mxu0 0.0
      %832 = vmatprep.subr.mxu0 0.0
      %833 = vmatpush1.msra.mxu0 0.0
      %834 = vmatprep.subr.mxu0 0.0
      %835 = vmatpush1.msra.mxu0 0.0
      %836 = vmatprep.subr.mxu0 0.0
      %837 = vmatpush1.msra.mxu0 0.0
      %838 = vmatprep.subr.mxu0 0.0
      %839 = vmatpush1.msra.mxu0 0.0
      %840 = vmatprep.mubr.f32.mxu0 0.0
      %841 = vmatmul.mubr.f32.gmra.mrb[0].mxu0 %v728
      %v842 = vpop.f32.mrb[0].mxu0
      %v843 = vadd.f32 0.0, %v842
      %v844 = vpop.f32.mrb[0].mxu0
      %845 = vmatprep.mubr.f32.mxu0 0.0
      %846 = vmatmul.mubr.f32.gmra.mrb[0].mxu0 %v729
      %v847 = vpop.f32.mrb[0].mxu0
      %v848 = vadd.f32 0.0, %v847
      %v849 = vpop.f32.mrb[0].mxu0
      %850 = vmatprep.mubr.f32.mxu0 0.0
      %851 = vmatmul.mubr.f32.gmra.mrb[0].mxu0 %v730
      %v852 = vpop.f32.mrb[0].mxu0
      %v853 = vadd.f32 0.0, %v852
      %v854 = vpop.f32.mrb[0].mxu0
      %855 = vmatprep.mubr.f32.mxu0 0.0
      %856 = vmatmul.mubr.f32.gmra.mrb[0].mxu0 %v731
      %v857 = vpop.f32.mrb[0].mxu0
      %v858 = vadd.f32 0.0, %v857
      %v859 = vpop.f32.mrb[0].mxu0
      %860 = vmatprep.mubr.f32.mxu0 0.0
      %861 = vmatmul.mubr.f32.gmra.mrb[0].mxu0 %v732
      %v862 = vpop.f32.mrb[0].mxu0
      %v863 = vadd.f32 0.0, %v862
      %v864 = vpop.f32.mrb[0].mxu0
      %865 = vmatprep.mubr.f32.mxu0 0.0
      %866 = vmatmul.mubr.f32.gmra.mrb[0].mxu0 %v733
      %v867 = vpop.f32.mrb[0].mxu0
      %v868 = vadd.f32 0.0, %v867
      %v869 = vpop.f32.mrb[0].mxu0
      %870 = vmatprep.mubr.f32.mxu0 0.0
      %871 = vmatmul.mubr.f32.gmra.mrb[0].mxu0 %v734
      %v872 = vpop.f32.mrb[0].mxu0
      %v873 = vadd.f32 0.0, %v872
      %v874 = vpop.f32.mrb[0].mxu0
      %875 = vmatprep.mubr.f32.mxu0 0.0
      %876 = vmatmul.mubr.f32.gmra.mrb[0].mxu0 %v735
      %v877 = vpop.f32.mrb[0].mxu0
      %v878 = vadd.f32 0.0, %v877
      %v879 = vpop.f32.mrb[0].mxu0
      %880 = vmatprep.mubr.f32.mxu0 0.0
      %881 = vmatmul.mubr.f32.gmra.mrb[0].mxu0 %v736
      %v882 = vpop.f32.mrb[0].mxu0
      %v883 = vadd.f32 0.0, %v882
      %v884 = vpop.f32.mrb[0].mxu0
      %885 = vmatprep.mubr.f32.mxu0 0.0
      %886 = vmatmul.mubr.f32.gmra.mrb[0].mxu0 %v737
      %v887 = vpop.f32.mrb[0].mxu0
      %v888 = vadd.f32 0.0, %v887
      %v889 = vpop.f32.mrb[0].mxu0
      %890 = vmatprep.mubr.f32.mxu0 0.0
      %891 = vmatmul.mubr.f32.gmra.mrb[0].mxu0 %v738
      %v892 = vpop.f32.mrb[0].mxu0
      %v893 = vadd.f32 0.0, %v892
      %v894 = vpop.f32.mrb[0].mxu0
      %895 = vmatprep.mubr.f32.mxu0 0.0
      %896 = vmatmul.mubr.f32.gmra.mrb[0].mxu0 %v739
      %v897 = vpop.f32.mrb[0].mxu0
      %v898 = vadd.f32 0.0, %v897
      %v899 = vpop.f32.mrb[0].mxu0
      %900 = vmatprep.mubr.f32.mxu0 0.0
      %901 = vmatmul.mubr.f32.gmra.mrb[0].mxu0 %v740
      %v902 = vpop.f32.mrb[0].mxu0
      %v903 = vadd.f32 0.0, %v902
      %v904 = vpop.f32.mrb[0].mxu0
      %905 = vmatprep.mubr.f32.mxu0 0.0
      %906 = vmatmul.mubr.f32.gmra.mrb[0].mxu0 %v741
      %v907 = vpop.f32.mrb[0].mxu0
      %v908 = vadd.f32 0.0, %v907
      %v909 = vpop.f32.mrb[0].mxu0
      %910 = vmatprep.mubr.f32.mxu0 0.0
      %911 = vmatmul.mubr.f32.gmra.mrb[0].mxu0 %v742
      %v912 = vpop.f32.mrb[0].mxu0
      %v913 = vadd.f32 0.0, %v912
      %v914 = vpop.f32.mrb[0].mxu0
      %915 = vmatprep.mubr.f32.mxu0 0.0
      %916 = vmatmul.mubr.f32.gmra.mrb[0].mxu0 %v743
      %v917 = vpop.f32.mrb[0].mxu0
      %v918 = vadd.f32 0.0, %v917
      %v919 = vpop.f32.mrb[0].mxu0
      %920 = vmatprep.mubr.f32.mxu0 0.0
      %921 = vmatmul.mubr.f32.gmra.mrb[0].mxu0 %v744
      %v922 = vpop.f32.mrb[0].mxu0
      %v923 = vadd.f32 0.0, %v922
      %v924 = vpop.f32.mrb[0].mxu0
      %925 = vmatprep.mubr.f32.mxu0 0.0
      %926 = vmatmul.mubr.f32.gmra.mrb[0].mxu0 %v745
      %v927 = vpop.f32.mrb[0].mxu0
      %v928 = vadd.f32 0.0, %v927
      %v929 = vpop.f32.mrb[0].mxu0
      %930 = vmatprep.mubr.f32.mxu0 0.0
      %931 = vmatmul.mubr.f32.gmra.mrb[0].mxu0 %v746
      %v932 = vpop.f32.mrb[0].mxu0
      %v933 = vadd.f32 0.0, %v932
      %v934 = vpop.f32.mrb[0].mxu0
      %935 = vmatprep.mubr.f32.mxu0 0.0
      %936 = vmatmul.mubr.f32.gmra.mrb[0].mxu0 %v747
      %v937 = vpop.f32.mrb[0].mxu0
      %v938 = vadd.f32 0.0, %v937
      %v939 = vpop.f32.mrb[0].mxu0
      %940 = vmatprep.mubr.f32.mxu0 0.0
      %941 = vmatmul.mubr.f32.gmra.mrb[0].mxu0 %v748
      %v942 = vpop.f32.mrb[0].mxu0
      %v943 = vadd.f32 0.0, %v942
      %v944 = vpop.f32.mrb[0].mxu0
      %945 = vmatprep.mubr.f32.mxu0 0.0
      %946 = vmatmul.mubr.f32.gmra.mrb[0].mxu0 %v749
      %v947 = vpop.f32.mrb[0].mxu0
      %v948 = vadd.f32 0.0, %v947
      %v949 = vpop.f32.mrb[0].mxu0
      %950 = vmatprep.mubr.f32.mxu0 0.0
      %951 = vmatmul.mubr.f32.gmra.mrb[0].mxu0 %v750
      %v952 = vpop.f32.mrb[0].mxu0
      %v953 = vadd.f32 0.0, %v952
      %v954 = vpop.f32.mrb[0].mxu0
      %955 = vmatprep.mubr.f32.mxu0 0.0
      %956 = vmatmul.mubr.f32.gmra.mrb[0].mxu0 %v751
      %v957 = vpop.f32.mrb[0].mxu0
      %v958 = vadd.f32 0.0, %v957
      %v959 = vpop.f32.mrb[0].mxu0
      %960 = vmatprep.mubr.f32.mxu0 0.0
      %961 = vmatmul.mubr.f32.gmra.mrb[0].mxu0 %v752
      %v962 = vpop.f32.mrb[0].mxu0
      %v963 = vadd.f32 0.0, %v962
      %v964 = vpop.f32.mrb[0].mxu0
      %965 = vmatprep.mubr.f32.mxu0 0.0
      %966 = vmatmul.mubr.f32.gmra.mrb[0].mxu0 %v753
      %v967 = vpop.f32.mrb[0].mxu0
      %v968 = vadd.f32 0.0, %v967
      %v969 = vpop.f32.mrb[0].mxu0
      %970 = vmatprep.mubr.f32.mxu0 0.0
      %971 = vmatmul.mubr.f32.gmra.mrb[0].mxu0 %v754
      %v972 = vpop.f32.mrb[0].mxu0
      %v973 = vadd.f32 0.0, %v972
      %v974 = vpop.f32.mrb[0].mxu0
      %975 = vmatprep.mubr.f32.mxu0 0.0
      %976 = vmatmul.mubr.f32.gmra.mrb[0].mxu0 %v755
      %v977 = vpop.f32.mrb[0].mxu0
      %v978 = vadd.f32 0.0, %v977
      %v979 = vpop.f32.mrb[0].mxu0
      %980 = vmatprep.mubr.f32.mxu0 0.0
      %981 = vmatmul.mubr.f32.gmra.mrb[0].mxu0 %v756
      %v982 = vpop.f32.mrb[0].mxu0
      %v983 = vadd.f32 0.0, %v982
      %v984 = vpop.f32.mrb[0].mxu0
      %985 = vmatprep.mubr.f32.mxu0 0.0
      %986 = vmatmul.mubr.f32.gmra.mrb[0].mxu0 %v757
      %v987 = vpop.f32.mrb[0].mxu0
      %v988 = vadd.f32 0.0, %v987
      %v989 = vpop.f32.mrb[0].mxu0
      %990 = vmatprep.mubr.f32.mxu0 0.0
      %991 = vmatmul.mubr.f32.gmra.mrb[0].mxu0 %v758
      %v992 = vpop.f32.mrb[0].mxu0
      %v993 = vadd.f32 0.0, %v992
      %v994 = vpop.f32.mrb[0].mxu0
      %995 = vmatprep.mubr.f32.mxu0 0.0
      %996 = vmatmul.mubr.f32.gmra.mrb[0].mxu0 %v759
      %v997 = vpop.f32.mrb[0].mxu0
      %v998 = vadd.f32 0.0, %v997
      %v999 = vpop.f32.mrb[0].mxu0
      %1000 = vdwg.mxu0
      %s1001 = smul.u32 %s21, 2
      %s1002 = sadd.s32 %s1001, %s22
      %s1003 = smul.u32 %s1002, 256
      %s1004 = sadd.s32 %s1003, 256
      %p1005 = scmp.gt.s32.totalorder %s1004, 640
      // Predicated region
      $region41: #{patch_deformation_mlp.2} parent=35 // pred_check
        %p1006 = pneg %p1005
      $region42: #{patch_deformation_mlp.2} parent=35 // pred_check_branch
        %1008 = sbr.rel (%p1006) target = $region44
      $region43: #{patch_deformation_mlp.2} parent=35 // pred_region
        %v1009 = vlaneseq
        %v1010 = vshrl.u32 %v1009, 7
        %v1011 = vadd.s32 %v1010, 8
        %v1012 = vadd.s32 %v1010, 16
        %v1013 = vadd.s32 %v1010, 24
        %v1014 = vadd.s32 %v1010, 32
        %v1015 = vadd.s32 %v1010, 40
        %v1016 = vadd.s32 %v1010, 48
        %v1017 = vadd.s32 %v1010, 56
        %v1018 = vadd.s32 %v1010, 64
        %v1019 = vadd.s32 %v1010, 72
        %v1020 = vadd.s32 %v1010, 80
        %v1021 = vadd.s32 %v1010, 88
        %v1022 = vadd.s32 %v1010, 96
        %v1023 = vadd.s32 %v1010, 104
        %v1024 = vadd.s32 %v1010, 112
        %v1025 = vadd.s32 %v1010, 120
        %v1026 = vadd.s32 %v1010, 128
        %v1027 = vadd.s32 %v1010, 136
        %v1028 = vadd.s32 %v1010, 144
        %v1029 = vadd.s32 %v1010, 152
        %v1030 = vadd.s32 %v1010, 160
        %v1031 = vadd.s32 %v1010, 168
        %v1032 = vadd.s32 %v1010, 176
        %v1033 = vadd.s32 %v1010, 184
        %v1034 = vadd.s32 %v1010, 192
        %v1035 = vadd.s32 %v1010, 200
        %v1036 = vadd.s32 %v1010, 208
        %v1037 = vadd.s32 %v1010, 216
        %v1038 = vadd.s32 %v1010, 224
        %v1039 = vadd.s32 %v1010, 232
        %v1040 = vadd.s32 %v1010, 240
        %v1041 = vadd.s32 %v1010, 248
        %v1042 = vstv %s1003
        %v1043 = vadd.s32 %v1010, %v1042
        %v1044 = vadd.s32 %v1011, %v1042
        %v1045 = vadd.s32 %v1012, %v1042
        %v1046 = vadd.s32 %v1013, %v1042
        %v1047 = vadd.s32 %v1014, %v1042
        %v1048 = vadd.s32 %v1015, %v1042
        %v1049 = vadd.s32 %v1016, %v1042
        %v1050 = vadd.s32 %v1017, %v1042
        %v1051 = vadd.s32 %v1018, %v1042
        %v1052 = vadd.s32 %v1019, %v1042
        %v1053 = vadd.s32 %v1020, %v1042
        %v1054 = vadd.s32 %v1021, %v1042
        %v1055 = vadd.s32 %v1022, %v1042
        %v1056 = vadd.s32 %v1023, %v1042
        %v1057 = vadd.s32 %v1024, %v1042
        %v1058 = vadd.s32 %v1025, %v1042
        %v1059 = vadd.s32 %v1026, %v1042
        %v1060 = vadd.s32 %v1027, %v1042
        %v1061 = vadd.s32 %v1028, %v1042
        %v1062 = vadd.s32 %v1029, %v1042
        %v1063 = vadd.s32 %v1030, %v1042
        %v1064 = vadd.s32 %v1031, %v1042
        %v1065 = vadd.s32 %v1032, %v1042
        %v1066 = vadd.s32 %v1033, %v1042
        %v1067 = vadd.s32 %v1034, %v1042
        %v1068 = vadd.s32 %v1035, %v1042
        %v1069 = vadd.s32 %v1036, %v1042
        %v1070 = vadd.s32 %v1037, %v1042
        %v1071 = vadd.s32 %v1038, %v1042
        %v1072 = vadd.s32 %v1039, %v1042
        %v1073 = vadd.s32 %v1040, %v1042
        %v1074 = vadd.s32 %v1041, %v1042
        %vm1075 = vcmp.lt.s32.totalorder %v1043, 640
        %vm1076 = vcmp.lt.s32.totalorder %v1044, 640
        %vm1077 = vcmp.lt.s32.totalorder %v1045, 640
        %vm1078 = vcmp.lt.s32.totalorder %v1046, 640
        %vm1079 = vcmp.lt.s32.totalorder %v1047, 640
        %vm1080 = vcmp.lt.s32.totalorder %v1048, 640
        %vm1081 = vcmp.lt.s32.totalorder %v1049, 640
        %vm1082 = vcmp.lt.s32.totalorder %v1050, 640
        %vm1083 = vcmp.lt.s32.totalorder %v1051, 640
        %vm1084 = vcmp.lt.s32.totalorder %v1052, 640
        %vm1085 = vcmp.lt.s32.totalorder %v1053, 640
        %vm1086 = vcmp.lt.s32.totalorder %v1054, 640
        %vm1087 = vcmp.lt.s32.totalorder %v1055, 640
        %vm1088 = vcmp.lt.s32.totalorder %v1056, 640
        %vm1089 = vcmp.lt.s32.totalorder %v1057, 640
        %vm1090 = vcmp.lt.s32.totalorder %v1058, 640
        %vm1091 = vcmp.lt.s32.totalorder %v1059, 640
        %vm1092 = vcmp.lt.s32.totalorder %v1060, 640
        %vm1093 = vcmp.lt.s32.totalorder %v1061, 640
        %vm1094 = vcmp.lt.s32.totalorder %v1062, 640
        %vm1095 = vcmp.lt.s32.totalorder %v1063, 640
        %vm1096 = vcmp.lt.s32.totalorder %v1064, 640
        %vm1097 = vcmp.lt.s32.totalorder %v1065, 640
        %vm1098 = vcmp.lt.s32.totalorder %v1066, 640
        %vm1099 = vcmp.lt.s32.totalorder %v1067, 640
        %vm1100 = vcmp.lt.s32.totalorder %v1068, 640
        %vm1101 = vcmp.lt.s32.totalorder %v1069, 640
        %vm1102 = vcmp.lt.s32.totalorder %v1070, 640
        %vm1103 = vcmp.lt.s32.totalorder %v1071, 640
        %vm1104 = vcmp.lt.s32.totalorder %v1072, 640
        %vm1105 = vcmp.lt.s32.totalorder %v1073, 640
        %vm1106 = vcmp.lt.s32.totalorder %v1074, 640
        %v1107 = vsel %vm1075, 1, 0
        %v1108 = vsel %vm1076, 1, 0
        %v1109 = vsel %vm1077, 1, 0
        %v1110 = vsel %vm1078, 1, 0
        %v1111 = vsel %vm1079, 1, 0
        %v1112 = vsel %vm1080, 1, 0
        %v1113 = vsel %vm1081, 1, 0
        %v1114 = vsel %vm1082, 1, 0
        %v1115 = vsel %vm1083, 1, 0
        %v1116 = vsel %vm1084, 1, 0
        %v1117 = vsel %vm1085, 1, 0
        %v1118 = vsel %vm1086, 1, 0
        %v1119 = vsel %vm1087, 1, 0
        %v1120 = vsel %vm1088, 1, 0
        %v1121 = vsel %vm1089, 1, 0
        %v1122 = vsel %vm1090, 1, 0
        %v1123 = vsel %vm1091, 1, 0
        %v1124 = vsel %vm1092, 1, 0
        %v1125 = vsel %vm1093, 1, 0
        %v1126 = vsel %vm1094, 1, 0
        %v1127 = vsel %vm1095, 1, 0
        %v1128 = vsel %vm1096, 1, 0
        %v1129 = vsel %vm1097, 1, 0
        %v1130 = vsel %vm1098, 1, 0
        %v1131 = vsel %vm1099, 1, 0
        %v1132 = vsel %vm1100, 1, 0
        %v1133 = vsel %vm1101, 1, 0
        %v1134 = vsel %vm1102, 1, 0
        %v1135 = vsel %vm1103, 1, 0
        %v1136 = vsel %vm1104, 1, 0
        %v1137 = vsel %vm1105, 1, 0
        %v1138 = vsel %vm1106, 1, 0
        %vm1139 = vcmp.eq.s32.totalorder %v1107, 1
        %vm1140 = vcmp.eq.s32.totalorder %v1108, 1
        %vm1141 = vcmp.eq.s32.totalorder %v1109, 1
        %vm1142 = vcmp.eq.s32.totalorder %v1110, 1
        %vm1143 = vcmp.eq.s32.totalorder %v1111, 1
        %vm1144 = vcmp.eq.s32.totalorder %v1112, 1
        %vm1145 = vcmp.eq.s32.totalorder %v1113, 1
        %vm1146 = vcmp.eq.s32.totalorder %v1114, 1
        %vm1147 = vcmp.eq.s32.totalorder %v1115, 1
        %vm1148 = vcmp.eq.s32.totalorder %v1116, 1
        %vm1149 = vcmp.eq.s32.totalorder %v1117, 1
        %vm1150 = vcmp.eq.s32.totalorder %v1118, 1
        %vm1151 = vcmp.eq.s32.totalorder %v1119, 1
        %vm1152 = vcmp.eq.s32.totalorder %v1120, 1
        %vm1153 = vcmp.eq.s32.totalorder %v1121, 1
        %vm1154 = vcmp.eq.s32.totalorder %v1122, 1
        %vm1155 = vcmp.eq.s32.totalorder %v1123, 1
        %vm1156 = vcmp.eq.s32.totalorder %v1124, 1
        %vm1157 = vcmp.eq.s32.totalorder %v1125, 1
        %vm1158 = vcmp.eq.s32.totalorder %v1126, 1
        %vm1159 = vcmp.eq.s32.totalorder %v1127, 1
        %vm1160 = vcmp.eq.s32.totalorder %v1128, 1
        %vm1161 = vcmp.eq.s32.totalorder %v1129, 1
        %vm1162 = vcmp.eq.s32.totalorder %v1130, 1
        %vm1163 = vcmp.eq.s32.totalorder %v1131, 1
        %vm1164 = vcmp.eq.s32.totalorder %v1132, 1
        %vm1165 = vcmp.eq.s32.totalorder %v1133, 1
        %vm1166 = vcmp.eq.s32.totalorder %v1134, 1
        %vm1167 = vcmp.eq.s32.totalorder %v1135, 1
        %vm1168 = vcmp.eq.s32.totalorder %v1136, 1
        %vm1169 = vcmp.eq.s32.totalorder %v1137, 1
        %vm1170 = vcmp.eq.s32.totalorder %v1138, 1
        %v1171 = vsel %vm1139, %v843, 0.0
        %v1172 = vsel %vm1140, %v848, 0.0
        %v1173 = vsel %vm1141, %v853, 0.0
        %v1174 = vsel %vm1142, %v858, 0.0
        %v1175 = vsel %vm1143, %v863, 0.0
        %v1176 = vsel %vm1144, %v868, 0.0
        %v1177 = vsel %vm1145, %v873, 0.0
        %v1178 = vsel %vm1146, %v878, 0.0
        %v1179 = vsel %vm1147, %v883, 0.0
        %v1180 = vsel %vm1148, %v888, 0.0
        %v1181 = vsel %vm1149, %v893, 0.0
        %v1182 = vsel %vm1150, %v898, 0.0
        %v1183 = vsel %vm1151, %v903, 0.0
        %v1184 = vsel %vm1152, %v908, 0.0
        %v1185 = vsel %vm1153, %v913, 0.0
        %v1186 = vsel %vm1154, %v918, 0.0
        %v1187 = vsel %vm1155, %v923, 0.0
        %v1188 = vsel %vm1156, %v928, 0.0
        %v1189 = vsel %vm1157, %v933, 0.0
        %v1190 = vsel %vm1158, %v938, 0.0
        %v1191 = vsel %vm1159, %v943, 0.0
        %v1192 = vsel %vm1160, %v948, 0.0
        %v1193 = vsel %vm1161, %v953, 0.0
        %v1194 = vsel %vm1162, %v958, 0.0
        %v1195 = vsel %vm1163, %v963, 0.0
        %v1196 = vsel %vm1164, %v968, 0.0
        %v1197 = vsel %vm1165, %v973, 0.0
        %v1198 = vsel %vm1166, %v978, 0.0
        %v1199 = vsel %vm1167, %v983, 0.0
        %v1200 = vsel %vm1168, %v988, 0.0
        %v1201 = vsel %vm1169, %v993, 0.0
        %v1202 = vsel %vm1170, %v998, 0.0
        %v1203 = vld [vmem:[%s254] sm:$0x1]
        %v1204 = vadd.f32 %v1171, %v1172
        %v1205 = vadd.f32 %v1204, %v1173
        %v1206 = vadd.f32 %v1205, %v1174
        %v1207 = vadd.f32 %v1206, %v1175
        %v1208 = vadd.f32 %v1207, %v1176
        %v1209 = vadd.f32 %v1208, %v1177
        %v1210 = vadd.f32 %v1209, %v1178
        %v1211 = vadd.f32 %v1210, %v1179
        %v1212 = vadd.f32 %v1211, %v1180
        %v1213 = vadd.f32 %v1212, %v1181
        %v1214 = vadd.f32 %v1213, %v1182
        %v1215 = vadd.f32 %v1214, %v1183
        %v1216 = vadd.f32 %v1215, %v1184
        %v1217 = vadd.f32 %v1216, %v1185
        %v1218 = vadd.f32 %v1217, %v1186
        %v1219 = vadd.f32 %v1218, %v1187
        %v1220 = vadd.f32 %v1219, %v1188
        %v1221 = vadd.f32 %v1220, %v1189
        %v1222 = vadd.f32 %v1221, %v1190
        %v1223 = vadd.f32 %v1222, %v1191
        %v1224 = vadd.f32 %v1223, %v1192
        %v1225 = vadd.f32 %v1224, %v1193
        %v1226 = vadd.f32 %v1225, %v1194
        %v1227 = vadd.f32 %v1226, %v1195
        %v1228 = vadd.f32 %v1227, %v1196
        %v1229 = vadd.f32 %v1228, %v1197
        %v1230 = vadd.f32 %v1229, %v1198
        %v1231 = vadd.f32 %v1230, %v1199
        %v1232 = vadd.f32 %v1231, %v1200
        %v1233 = vadd.f32 %v1232, %v1201
        %v1234 = vadd.f32 %v1233, %v1202
        %v1235 = vrot.slane %v1234, 4
        %v1236 = vadd.f32 %v1234, %v1235
        %v1237 = vrot.slane %v1236, 2
        %v1238 = vadd.f32 %v1236, %v1237
        %v1239 = vrot.slane %v1238, 1
        %v1240 = vadd.f32 %v1238, %v1239
        %v1241 = vadd.f32 %v1203, %v1240
        %1242 = vst [vmem:[%s254] sm:$0x1] %v1241
        %v1243 = vld [vmem:[%s257] sm:$0x1]
        %v1244 = vmul.f32 %v1171, %v1171
        %v1245 = vmul.f32 %v1172, %v1172
        %v1246 = vmul.f32 %v1173, %v1173
        %v1247 = vmul.f32 %v1174, %v1174
        %v1248 = vmul.f32 %v1175, %v1175
        %v1249 = vmul.f32 %v1176, %v1176
        %v1250 = vmul.f32 %v1177, %v1177
        %v1251 = vmul.f32 %v1178, %v1178
        %v1252 = vmul.f32 %v1179, %v1179
        %v1253 = vmul.f32 %v1180, %v1180
        %v1254 = vmul.f32 %v1181, %v1181
        %v1255 = vmul.f32 %v1182, %v1182
        %v1256 = vmul.f32 %v1183, %v1183
        %v1257 = vmul.f32 %v1184, %v1184
        %v1258 = vmul.f32 %v1185, %v1185
        %v1259 = vmul.f32 %v1186, %v1186
        %v1260 = vmul.f32 %v1187, %v1187
        %v1261 = vmul.f32 %v1188, %v1188
        %v1262 = vmul.f32 %v1189, %v1189
        %v1263 = vmul.f32 %v1190, %v1190
        %v1264 = vmul.f32 %v1191, %v1191
        %v1265 = vmul.f32 %v1192, %v1192
        %v1266 = vmul.f32 %v1193, %v1193
        %v1267 = vmul.f32 %v1194, %v1194
        %v1268 = vmul.f32 %v1195, %v1195
        %v1269 = vmul.f32 %v1196, %v1196
        %v1270 = vmul.f32 %v1197, %v1197
        %v1271 = vmul.f32 %v1198, %v1198
        %v1272 = vmul.f32 %v1199, %v1199
        %v1273 = vmul.f32 %v1200, %v1200
        %v1274 = vmul.f32 %v1201, %v1201
        %v1275 = vmul.f32 %v1202, %v1202
        %v1276 = vadd.f32 %v1244, %v1245
        %v1277 = vadd.f32 %v1276, %v1246
        %v1278 = vadd.f32 %v1277, %v1247
        %v1279 = vadd.f32 %v1278, %v1248
        %v1280 = vadd.f32 %v1279, %v1249
        %v1281 = vadd.f32 %v1280, %v1250
        %v1282 = vadd.f32 %v1281, %v1251
        %v1283 = vadd.f32 %v1282, %v1252
        %v1284 = vadd.f32 %v1283, %v1253
        %v1285 = vadd.f32 %v1284, %v1254
        %v1286 = vadd.f32 %v1285, %v1255
        %v1287 = vadd.f32 %v1286, %v1256
        %v1288 = vadd.f32 %v1287, %v1257
        %v1289 = vadd.f32 %v1288, %v1258
        %v1290 = vadd.f32 %v1289, %v1259
        %v1291 = vadd.f32 %v1290, %v1260
        %v1292 = vadd.f32 %v1291, %v1261
        %v1293 = vadd.f32 %v1292, %v1262
        %v1294 = vadd.f32 %v1293, %v1263
        %v1295 = vadd.f32 %v1294, %v1264
        %v1296 = vadd.f32 %v1295, %v1265
        %v1297 = vadd.f32 %v1296, %v1266
        %v1298 = vadd.f32 %v1297, %v1267
        %v1299 = vadd.f32 %v1298, %v1268
        %v1300 = vadd.f32 %v1299, %v1269
        %v1301 = vadd.f32 %v1300, %v1270
        %v1302 = vadd.f32 %v1301, %v1271
        %v1303 = vadd.f32 %v1302, %v1272
        %v1304 = vadd.f32 %v1303, %v1273
        %v1305 = vadd.f32 %v1304, %v1274
        %v1306 = vadd.f32 %v1305, %v1275
        %v1307 = vrot.slane %v1306, 4
        %v1308 = vadd.f32 %v1306, %v1307
        %v1309 = vrot.slane %v1308, 2
        %v1310 = vadd.f32 %v1308, %v1309
        %v1311 = vrot.slane %v1310, 1
        %v1312 = vadd.f32 %v1310, %v1311
        %v1313 = vadd.f32 %v1243, %v1312
        %1314 = vst [vmem:[%s257] sm:$0x1] %v1313
      $region44: #{patch_deformation_mlp.2} parent=35 // pred_fallthru
        _
      %p1315 = scmp.le.s32.totalorder %s1004, 640
      // Predicated region
      $region45: #{patch_deformation_mlp.2} parent=35 // pred_check
        %p1316 = pneg %p1315
      $region46: #{patch_deformation_mlp.2} parent=35 // pred_check_branch
        %1318 = sbr.rel (%p1316) target = $region48
      $region47: #{patch_deformation_mlp.2} parent=35 // pred_region
        %v1319 = vld [vmem:[%s254] sm:$0x1]
        %v1320 = vadd.f32 %v843, %v848
        %v1321 = vadd.f32 %v1320, %v853
        %v1322 = vadd.f32 %v1321, %v858
        %v1323 = vadd.f32 %v1322, %v863
        %v1324 = vadd.f32 %v1323, %v868
        %v1325 = vadd.f32 %v1324, %v873
        %v1326 = vadd.f32 %v1325, %v878
        %v1327 = vadd.f32 %v1326, %v883
        %v1328 = vadd.f32 %v1327, %v888
        %v1329 = vadd.f32 %v1328, %v893
        %v1330 = vadd.f32 %v1329, %v898
        %v1331 = vadd.f32 %v1330, %v903
        %v1332 = vadd.f32 %v1331, %v908
        %v1333 = vadd.f32 %v1332, %v913
        %v1334 = vadd.f32 %v1333, %v918
        %v1335 = vadd.f32 %v1334, %v923
        %v1336 = vadd.f32 %v1335, %v928
        %v1337 = vadd.f32 %v1336, %v933
        %v1338 = vadd.f32 %v1337, %v938
        %v1339 = vadd.f32 %v1338, %v943
        %v1340 = vadd.f32 %v1339, %v948
        %v1341 = vadd.f32 %v1340, %v953
        %v1342 = vadd.f32 %v1341, %v958
        %v1343 = vadd.f32 %v1342, %v963
        %v1344 = vadd.f32 %v1343, %v968
        %v1345 = vadd.f32 %v1344, %v973
        %v1346 = vadd.f32 %v1345, %v978
        %v1347 = vadd.f32 %v1346, %v983
        %v1348 = vadd.f32 %v1347, %v988
        %v1349 = vadd.f32 %v1348, %v993
        %v1350 = vadd.f32 %v1349, %v998
        %v1351 = vrot.slane %v1350, 4
        %v1352 = vadd.f32 %v1350, %v1351
        %v1353 = vrot.slane %v1352, 2
        %v1354 = vadd.f32 %v1352, %v1353
        %v1355 = vrot.slane %v1354, 1
        %v1356 = vadd.f32 %v1354, %v1355
        %v1357 = vadd.f32 %v1319, %v1356
        %1358 = vst [vmem:[%s254] sm:$0x1] %v1357
        %v1359 = vld [vmem:[%s257] sm:$0x1]
        %v1360 = vmul.f32 %v843, %v843
        %v1361 = vmul.f32 %v848, %v848
        %v1362 = vmul.f32 %v853, %v853
        %v1363 = vmul.f32 %v858, %v858
        %v1364 = vmul.f32 %v863, %v863
        %v1365 = vmul.f32 %v868, %v868
        %v1366 = vmul.f32 %v873, %v873
        %v1367 = vmul.f32 %v878, %v878
        %v1368 = vmul.f32 %v883, %v883
        %v1369 = vmul.f32 %v888, %v888
        %v1370 = vmul.f32 %v893, %v893
        %v1371 = vmul.f32 %v898, %v898
        %v1372 = vmul.f32 %v903, %v903
        %v1373 = vmul.f32 %v908, %v908
        %v1374 = vmul.f32 %v913, %v913
        %v1375 = vmul.f32 %v918, %v918
        %v1376 = vmul.f32 %v923, %v923
        %v1377 = vmul.f32 %v928, %v928
        %v1378 = vmul.f32 %v933, %v933
        %v1379 = vmul.f32 %v938, %v938
        %v1380 = vmul.f32 %v943, %v943
        %v1381 = vmul.f32 %v948, %v948
        %v1382 = vmul.f32 %v953, %v953
        %v1383 = vmul.f32 %v958, %v958
        %v1384 = vmul.f32 %v963, %v963
        %v1385 = vmul.f32 %v968, %v968
        %v1386 = vmul.f32 %v973, %v973
        %v1387 = vmul.f32 %v978, %v978
        %v1388 = vmul.f32 %v983, %v983
        %v1389 = vmul.f32 %v988, %v988
        %v1390 = vmul.f32 %v993, %v993
        %v1391 = vmul.f32 %v998, %v998
        %v1392 = vadd.f32 %v1360, %v1361
        %v1393 = vadd.f32 %v1392, %v1362
        %v1394 = vadd.f32 %v1393, %v1363
        %v1395 = vadd.f32 %v1394, %v1364
        %v1396 = vadd.f32 %v1395, %v1365
        %v1397 = vadd.f32 %v1396, %v1366
        %v1398 = vadd.f32 %v1397, %v1367
        %v1399 = vadd.f32 %v1398, %v1368
        %v1400 = vadd.f32 %v1399, %v1369
        %v1401 = vadd.f32 %v1400, %v1370
        %v1402 = vadd.f32 %v1401, %v1371
        %v1403 = vadd.f32 %v1402, %v1372
        %v1404 = vadd.f32 %v1403, %v1373
        %v1405 = vadd.f32 %v1404, %v1374
        %v1406 = vadd.f32 %v1405, %v1375
        %v1407 = vadd.f32 %v1406, %v1376
        %v1408 = vadd.f32 %v1407, %v1377
        %v1409 = vadd.f32 %v1408, %v1378
        %v1410 = vadd.f32 %v1409, %v1379
        %v1411 = vadd.f32 %v1410, %v1380
        %v1412 = vadd.f32 %v1411, %v1381
        %v1413 = vadd.f32 %v1412, %v1382
        %v1414 = vadd.f32 %v1413, %v1383
        %v1415 = vadd.f32 %v1414, %v1384
        %v1416 = vadd.f32 %v1415, %v1385
        %v1417 = vadd.f32 %v1416, %v1386
        %v1418 = vadd.f32 %v1417, %v1387
        %v1419 = vadd.f32 %v1418, %v1388
        %v1420 = vadd.f32 %v1419, %v1389
        %v1421 = vadd.f32 %v1420, %v1390
        %v1422 = vadd.f32 %v1421, %v1391
        %v1423 = vrot.slane %v1422, 4
        %v1424 = vadd.f32 %v1422, %v1423
        %v1425 = vrot.slane %v1424, 2
        %v1426 = vadd.f32 %v1424, %v1425
        %v1427 = vrot.slane %v1426, 1
        %v1428 = vadd.f32 %v1426, %v1427
        %v1429 = vadd.f32 %v1359, %v1428
        %1430 = vst [vmem:[%s257] sm:$0x1] %v1429
      $region48: #{patch_deformation_mlp.2} parent=35 // pred_fallthru
        _
      %p1431 = scmp.lt.s32.totalorder %s21, 1
      %s1432 = scalar_select %p1431, %s21, 1
      %s1433 = scalar_lea.vmem %s4, %s1432
      %p1434 = scmp.lt.s32.totalorder %s21, 1
      %s1435 = scalar_select %p1434, %s21, 1
      %s1436 = scalar_lea.vmem %s5, %s1435
      // Predicated region
      $region49: #{patch_deformation_mlp.2} parent=35 // pred_check
        %p1437 = pneg %p140
      $region50: #{patch_deformation_mlp.2} parent=35 // pred_check_branch
        %1439 = sbr.rel (%p1437) target = $region52
      $region51: #{patch_deformation_mlp.2} parent=35 // pred_region
        _
      $region52: #{patch_deformation_mlp.2} parent=35 // pred_fallthru
        _
      // Predicated region
      $region53: #{patch_deformation_mlp.2} parent=35 // pred_check
        %p1440 = pneg %p166
      $region54: #{patch_deformation_mlp.2} parent=35 // pred_check_branch
        %1442 = sbr.rel (%p1440) target = $region56
      $region55: #{patch_deformation_mlp.2} parent=35 // pred_region
        _
      $region56: #{patch_deformation_mlp.2} parent=35 // pred_fallthru
        _
    $region36: #{patch_deformation_mlp.2} parent=5 // pred_fallthru
      _
    %p1443 = scmp.le.s32.totalorder 2, %s12
    // Predicated region
    $region57: #{patch_deformation_mlp.2} parent=5 // pred_check
      %p1444 = pneg %p1443
    $region58: #{patch_deformation_mlp.2} parent=5 // pred_check_branch
      %1446 = sbr.rel (%p1444) target = $region60
    $region59: #{patch_deformation_mlp.2} parent=5 // pred_region
      %s1447 = ssub.s32 %s12, 2
      // Predicated region
      $region61: #{patch_deformation_mlp.2} parent=59 // pred_check
        %p1448 = pneg %p146
      $region62: #{patch_deformation_mlp.2} parent=59 // pred_check_branch
        %1450 = sbr.rel (%p1448) target = $region64
      $region63: #{patch_deformation_mlp.2} parent=59 // pred_region
        %p1451 = scmp.lt.s32.totalorder %s23, 1
        %s1452 = scalar_select %p1451, %s23, 1
        %s1453 = scalar_lea.vmem %s4, %s1452
      $region64: #{patch_deformation_mlp.2} parent=59 // pred_fallthru
        _
      // Predicated region
      $region65: #{patch_deformation_mlp.2} parent=59 // pred_check
        %p1454 = pneg %p172
      $region66: #{patch_deformation_mlp.2} parent=59 // pred_check_branch
        %1456 = sbr.rel (%p1454) target = $region68
      $region67: #{patch_deformation_mlp.2} parent=59 // pred_region
        %p1457 = scmp.lt.s32.totalorder %s23, 1
        %s1458 = scalar_select %p1457, %s23, 1
        %s1459 = scalar_lea.vmem %s5, %s1458
      $region68: #{patch_deformation_mlp.2} parent=59 // pred_fallthru
        _
    $region60: #{patch_deformation_mlp.2} parent=5 // pred_fallthru
      _
  $region6: #{patch_deformation_mlp.2} parent=0 // loop_footer
    %s16 = sadd.s32 1, %s12
  $region7: #{patch_deformation_mlp.2} parent=0 // loop_footer_branch
    %11 = sbr.rel target = $region3
  $region8: #{patch_deformation_mlp.2} parent=0 // loop_exit
    _

</llo_original>
